<compile_context>
chip_gen: v7x
topology: tpu7x:2x2x1
jax: 0.10.0
libtpu: 0.0.40
codegen_flags: <defaults>
</compile_context>

<pallas_src>
import math
import functools

import jax
import jax.numpy as jnp
from jax import lax
from jax.experimental import pallas as pl
from jax.experimental.pallas import tpu as pltpu


# ----------------------------------------------------------------------------
# Helpers
# ----------------------------------------------------------------------------
def _round_up(n: int, m: int) -> int:
    return ((n + m - 1) // m) * m


def rel_positional_encoding(T: int, D: int) -> jnp.ndarray:
    """pe of shape (2*T - 1, D); row idx corresponds to relative pos T-1-idx."""
    pos = jnp.arange(T - 1, -T, -1, dtype=jnp.float32)[:, None]        # (2T-1, 1)
    div = jnp.exp(jnp.arange(0, D, 2, dtype=jnp.float32)
                  * (-math.log(10000.0) / D))                          # (D/2,)
    pe = jnp.zeros((2 * T - 1, D), jnp.float32)
    pe = pe.at[:, 0::2].set(jnp.sin(pos * div))
    pe = pe.at[:, 1::2].set(jnp.cos(pos * div))
    return pe


def _vmem_limit_bytes() -> int:
    """Generation-aware VMEM limit (~3/4 of physical: 48 MiB on v7x,
    96 MiB on v5e/v6e); conservative 48 MiB fallback."""
    try:
        cap = getattr(pltpu.get_tpu_info(), "vmem_capacity_bytes", None)
        if cap:
            return int(cap) * 3 // 4
    except Exception:
        pass
    return 48 * 1024 * 1024


def _const_spec(shape, single_buffer: bool) -> pl.BlockSpec:
    """BlockSpec for a grid-invariant operand (constant index map).  When
    single_buffer=True, request 1-deep buffering so invariant weights are not
    double-buffered in VMEM."""
    ndim = len(shape)
    index_map = lambda *_: (0,) * ndim
    if single_buffer:
        try:
            return pl.BlockSpec(shape, index_map, pipeline_mode=pl.Buffered(1))
        except Exception:
            return pl.BlockSpec(shape, index_map)
    return pl.BlockSpec(shape, index_map)


# ----------------------------------------------------------------------------
# Kernel 1: LayerNorm + Q/K/V projections (full-width GEMMs)
# ----------------------------------------------------------------------------
def _ln_qkv_kernel(x_ref, gamma_ref, beta_ref,
                   wq_ref, bq_ref, wk_ref, bk_ref, wv_ref, bv_ref,
                   u_bias_ref, v_bias_ref,
                   qu_ref, qv_ref, k_ref, val_ref):
    x = x_ref[0]                                                       # (TQ, D) f32

    # pre-norm LayerNorm (eps = 1e-5), f32 on the VPU
    mean = jnp.mean(x, axis=-1, keepdims=True)
    var = jnp.mean(jnp.square(x - mean), axis=-1, keepdims=True)
    y = (x - mean) * lax.rsqrt(var + 1e-5) * gamma_ref[...] + beta_ref[...]
    y_bf = y.astype(jnp.bfloat16)                                      # MXU operand

    # full-width (TQ, D) @ (D, D) GEMMs; 1/sqrt(dh) already folded into wq/bq.
    q = jnp.dot(y_bf, wq_ref[...], preferred_element_type=jnp.float32) + bq_ref[...]
    k = jnp.dot(y_bf, wk_ref[...], preferred_element_type=jnp.float32) + bk_ref[...]
    v = jnp.dot(y_bf, wv_ref[...], preferred_element_type=jnp.float32) + bv_ref[...]

    # u/v biases (already scaled) added in f32, cast at the matmul boundary
    qu_ref[0] = (q + u_bias_ref[...]).astype(qu_ref.dtype)
    qv_ref[0] = (q + v_bias_ref[...]).astype(qv_ref.dtype)
    k_ref[0] = k.astype(k_ref.dtype)
    val_ref[0] = v.astype(val_ref.dtype)


# ----------------------------------------------------------------------------
# Kernel 2: relative attention core (query tiles x heads on the grid)
# ----------------------------------------------------------------------------
def _relative_shift(pos_raw, T: int, row_offset):
    """out[r, j] = pos_raw[r, j + (T-1) - (row_offset + r)], shape (TQ, T).
    Doubling shift-and-select: ceil(log2(T)) static lane slices + row selects."""
    TQ = pos_raw.shape[0]
    if T == 1:
        return pos_raw[:, :1]
    K = (T - 1).bit_length()
    row = lax.broadcasted_iota(jnp.int32, (TQ, 1), 0)
    amt = (T - 1) - row_offset - row                                   # per-row left shift
    cur = pos_raw[:, : T - 1 + (1 << K)]
    for k in range(K - 1, -1, -1):
        step = 1 << k
        w = T - 1 + step
        take = jnp.bitwise_and(amt, step) > 0                          # (TQ, 1) bool
        cur = jnp.where(take, cur[:, step:step + w], cur[:, :w])
    return cur                                                         # (TQ, T)


def _rel_attn_kernel(*refs, T: int, TQ: int, has_mask: bool):
    if has_mask:
        qu_ref, qv_ref, kT_ref, v_ref, pT_ref, mask_ref, ctx_ref = refs
    else:
        qu_ref, qv_ref, kT_ref, v_ref, pT_ref, ctx_ref = refs
        mask_ref = None

    qi = pl.program_id(2)

    qu = qu_ref[0, 0]                                                  # (TQ, dh) bf16
    qv = qv_ref[0, 0]                                                  # (TQ, dh) bf16
    kT = kT_ref[0, 0]                                                  # (dh, T)  bf16
    val = v_ref[0, 0]                                                  # (T, dh)  bf16
    pT = pT_ref[0]                                                     # (dh, S2p) bf16

    # plain (M,K)@(K,N) orientation everywhere (RHS pre-transposed in wrapper);
    # scale and u/v biases are already folded into qu/qv.
    content = jnp.dot(qu, kT, preferred_element_type=jnp.float32)      # (TQ, T)
    pos_raw = jnp.dot(qv, pT, preferred_element_type=jnp.float32)      # (TQ, S2p)
    score = content + _relative_shift(pos_raw, T, qi * TQ)             # (TQ, T)

    if has_mask:
        score = jnp.where(mask_ref[0] > 0, -1e9, score)                # masked_fill_

    # softmax over keys (f32); exact reciprocal on the EUP
    score = score - jnp.max(score, axis=-1, keepdims=True)
    e = jnp.exp(score)
    attn = e * pl.reciprocal(jnp.sum(e, axis=-1, keepdims=True))
    # attention dropout -> identity (inference)

    ctx = jnp.dot(attn.astype(jnp.bfloat16), val,
                  preferred_element_type=jnp.float32)                  # (TQ, dh)
    ctx_ref[0, 0] = ctx.astype(ctx_ref.dtype)


# ----------------------------------------------------------------------------
# Kernel 3: fused output projection (single full-width GEMM)
# ----------------------------------------------------------------------------
def _out_proj_kernel(ctx_ref, wo_ref, bo_ref, o_ref):
    o = jnp.dot(ctx_ref[0], wo_ref[...], preferred_element_type=jnp.float32)
    o_ref[0] = (o + bo_ref[...]).astype(o_ref.dtype)
    # output dropout -> identity (inference)


# ----------------------------------------------------------------------------
# Wrapper
# ----------------------------------------------------------------------------
def multi_headed_self_attention(inputs, params, num_heads, mask=None, *, q_tile=128):
    B, T, D = inputs.shape
    H = num_heads
    dh = D // H
    scale = 1.0 / math.sqrt(dh)

    TQ = T if T <= q_tile else q_tile
    NQ = pl.cdiv(T, TQ)

    S2 = 2 * T - 1
    Kbits = (T - 1).bit_length()
    need = (T - 1 + (1 << Kbits)) if T > 1 else 1
    S2p = _round_up(max(S2, need), 128)                                # lane-dense pad

    # --- grid-invariant prep (wrapper-side, computed once) -------------------
    # positional encoding + pos projection, stored pre-transposed (H, dh, S2p)
    pe = rel_positional_encoding(T, D)
    pe = jnp.concatenate([pe, jnp.zeros((S2p - S2, D), jnp.float32)], axis=0)
    pT = (pe @ params["wpos"]).reshape(S2p, H, dh).transpose(1, 2, 0)
    pT = pT.astype(jnp.bfloat16)                                       # (H, dh, S2p)

    # fold 1/sqrt(dh) into the query-side weights/biases (grid-invariant)
    wq = (params["wq"] * scale).astype(jnp.bfloat16)
    wk = params["wk"].astype(jnp.bfloat16)
    wv = params["wv"].astype(jnp.bfloat16)
    wo = params["wo"].astype(jnp.bfloat16)
    bq = (params["bq"] * scale).astype(jnp.float32)
    bk = params["bk"].astype(jnp.float32)
    bv = params["bv"].astype(jnp.float32)
    bo = params["bo"].astype(jnp.float32)
    u_flat = (params["u"].reshape(1, D) * scale).astype(jnp.float32)
    v_flat = (params["v"].reshape(1, D) * scale).astype(jnp.float32)
    gamma = params["gamma"].astype(jnp.float32)
    beta = params["beta"].astype(jnp.float32)

    has_mask = mask is not None
    per_query_mask = False
    if has_mask:
        mask = mask.astype(jnp.int32)
        if mask.ndim == 2:
            mask = mask[:, None, :]
        per_query_mask = mask.shape[1] != 1

    vmem_limit = _vmem_limit_bytes()

    def run(single_buffer):
        cs = functools.partial(_const_spec, single_buffer=single_buffer)
        row_spec = pl.BlockSpec((1, TQ, D), lambda b, r: (b, r, 0))

        # ---- kernel 1: LayerNorm + Q/K/V projections -------------------------
        qu, qv, k, v = pl.pallas_call(
            _ln_qkv_kernel,
            grid=(B, NQ),
            out_shape=[jax.ShapeDtypeStruct((B, T, D), jnp.bfloat16)] * 4,
            in_specs=[
                row_spec,                               # x
                cs((1, D)), cs((1, D)),                 # ln gamma, beta
                cs((D, D)), cs((1, D)),                 # wq (scaled), bq (scaled)
                cs((D, D)), cs((1, D)),                 # wk, bk
                cs((D, D)), cs((1, D)),                 # wv, bv
                cs((1, D)), cs((1, D)),                 # u_bias, v_bias (scaled, flat)
            ],
            out_specs=[row_spec] * 4,
            compiler_params=pltpu.CompilerParams(
                dimension_semantics=("parallel", "parallel"),
                vmem_limit_bytes=vmem_limit),
        )(inputs, gamma, beta, wq, bq, wk, bk, wv, bv, u_flat, v_flat)

        # head-major layout plumbing (pure relayout, done by XLA)
        qu_hm = qu.reshape(B, T, H, dh).transpose(0, 2, 1, 3)          # (B, H, T, dh)
        qv_hm = qv.reshape(B, T, H, dh).transpose(0, 2, 1, 3)          # (B, H, T, dh)
        kT_hm = k.reshape(B, T, H, dh).transpose(0, 2, 3, 1)           # (B, H, dh, T)
        v_hm = v.reshape(B, T, H, dh).transpose(0, 2, 1, 3)            # (B, H, T, dh)

        # ---- kernel 2: relative attention core, grid (B, H, q-tiles) ---------
        attn_in_specs = [
            pl.BlockSpec((1, 1, TQ, dh), lambda b, h, q: (b, h, q, 0)),   # qu
            pl.BlockSpec((1, 1, TQ, dh), lambda b, h, q: (b, h, q, 0)),   # qv
            pl.BlockSpec((1, 1, dh, T), lambda b, h, q: (b, h, 0, 0)),    # k^T
            pl.BlockSpec((1, 1, T, dh), lambda b, h, q: (b, h, 0, 0)),    # v
            pl.BlockSpec((1, dh, S2p), lambda b, h, q: (h, 0, 0)),        # p^T
        ]
        attn_args = [qu_hm, qv_hm, kT_hm, v_hm, pT]
        if has_mask:
            if per_query_mask:
                attn_in_specs.append(
                    pl.BlockSpec((1, TQ, T), lambda b, h, q: (b, q, 0)))
            else:
                attn_in_specs.append(
                    pl.BlockSpec((1, 1, T), lambda b, h, q: (b, 0, 0)))
            attn_args.append(mask)

        ctx = pl.pallas_call(
            functools.partial(_rel_attn_kernel, T=T, TQ=TQ, has_mask=has_mask),
            grid=(B, H, NQ),
            out_shape=jax.ShapeDtypeStruct((B, H, T, dh), jnp.bfloat16),
            in_specs=attn_in_specs,
            out_specs=pl.BlockSpec((1, 1, TQ, dh), lambda b, h, q: (b, h, q, 0)),
            compiler_params=pltpu.CompilerParams(
                dimension_semantics=("parallel", "parallel", "parallel"),
                vmem_limit_bytes=vmem_limit),
        )(*attn_args)

        ctx_all = ctx.transpose(0, 2, 1, 3).reshape(B, T, D)           # (B, T, D)

        # ---- kernel 3: single fused output projection -------------------------
        out = pl.pallas_call(
            _out_proj_kernel,
            grid=(B, NQ),
            out_shape=jax.ShapeDtypeStruct((B, T, D), jnp.float32),
            in_specs=[
                pl.BlockSpec((1, TQ, D), lambda b, r: (b, r, 0)),      # ctx
                cs((D, D)), cs((1, D)),                                # wo, bo
            ],
            out_specs=pl.BlockSpec((1, TQ, D), lambda b, r: (b, r, 0)),
            compiler_params=pltpu.CompilerParams(
                dimension_semantics=("parallel", "parallel"),
                vmem_limit_bytes=vmem_limit),
        )(ctx_all, wo, bo)
        return out

    try:
        return run(single_buffer=True)
    except Exception:
        # Older runtimes may reject 1-deep pipeline_mode; fall back to the
        # default double-buffered specs (identical results, slightly more VMEM).
        return run(single_buffer=False)


# ----------------------------------------------------------------------------
# Deterministic synthetic parameters (standard nn.Linear-like layout)
# ----------------------------------------------------------------------------
def init_params(key, D, H):
    dh = D // H
    ks = jax.random.split(key, 11)
    s = 1.0 / math.sqrt(D)
    sh = 1.0 / math.sqrt(dh)
    rnd = lambda k, shape, scale: scale * jax.random.normal(k, shape, jnp.float32)
    return dict(
        gamma=jnp.ones((1, D), jnp.float32),
        beta=jnp.zeros((1, D), jnp.float32),
        wq=rnd(ks[0], (D, D), s), bq=rnd(ks[1], (1, D), s),
        wk=rnd(ks[2], (D, D), s), bk=rnd(ks[3], (1, D), s),
        wv=rnd(ks[4], (D, D), s), bv=rnd(ks[5], (1, D), s),
        wpos=rnd(ks[6], (D, D), s),
        u=rnd(ks[7], (H, dh), sh),
        v=rnd(ks[8], (H, dh), sh),
        wo=rnd(ks[9], (D, D), s), bo=rnd(ks[10], (1, D), s),
    )


# ----------------------------------------------------------------------------
# Pure-JAX f32 reference (mirrors the PyTorch forward, incl. pad/reshape shift)
# ----------------------------------------------------------------------------
def _reference(x, params, H, mask=None):
    B, T, D = x.shape
    dh = D // H
    S2 = 2 * T - 1
    pe = rel_positional_encoding(T, D)

    mean = x.mean(-1, keepdims=True)
    var = ((x - mean) ** 2).mean(-1, keepdims=True)
    y = (x - mean) / jnp.sqrt(var + 1e-5) * params["gamma"][0] + params["beta"][0]

    q = (y @ params["wq"] + params["bq"][0]).reshape(B, T, H, dh)
    k = (y @ params["wk"] + params["bk"][0]).reshape(B, T, H, dh)
    val = (y @ params["wv"] + params["bv"][0]).reshape(B, T, H, dh)
    p = (pe @ params["wpos"]).reshape(S2, H, dh)

    content = jnp.einsum("bihd,bjhd->bhij", q + params["u"], k)
    pos_score = jnp.einsum("bihd,rhd->bhir", q + params["v"], p)       # (B,H,T,S2)

    zeros = jnp.zeros((B, H, T, 1), jnp.float32)
    padded = jnp.concatenate([zeros, pos_score], axis=-1).reshape(B, H, S2 + 1, T)
    pos_score = padded[:, :, 1:].reshape(B, H, T, S2)[:, :, :, : S2 // 2 + 1]

    score = (content + pos_score) / math.sqrt(dh)
    if mask is not None:
        score = jnp.where(mask[:, None] > 0, -1e9, score)
    attn = jax.nn.softmax(score, axis=-1)
    ctx = jnp.einsum("bhij,bjhd->bihd", attn, val).reshape(B, T, D)
    return ctx @ params["wo"] + params["bo"][0]


if __name__ == "__main__":
    B, T, D, H = 2, 8, 32, 4
    key = jax.random.PRNGKey(0)
    kx, kp = jax.random.split(key)
    x = jax.random.normal(kx, (B, T, D), jnp.float32)
    params = init_params(kp, D, H)

    # --- unmasked path ---
    out = multi_headed_self_attention(x, params, H, mask=None)
    out = jax.block_until_ready(out)
    assert out.shape == (B, T, D)
    assert bool(jnp.all(jnp.isfinite(out)))

    ref = _reference(x, params, H)
    err = jnp.abs(out - ref)
    max_err = float(jnp.max(err))
    mean_err = float(jnp.mean(err))
    # bf16 MXU operands with f32 accumulation => looser tolerance than all-f32
    assert max_err < 1e-1, f"max abs err vs reference: {max_err}"
    assert mean_err < 2e-2, f"mean abs err vs reference: {mean_err}"

    # --- masked path (padding mask over the last two key positions) ---
    key_mask = jnp.broadcast_to((jnp.arange(T) >= T - 2)[None, None, :],
                                (B, 1, T)).astype(jnp.int32)
    out_m = multi_headed_self_attention(x, params, H, mask=key_mask)
    out_m = jax.block_until_ready(out_m)
    assert bool(jnp.all(jnp.isfinite(out_m)))

    ref_m = _reference(x, params, H, key_mask)
    err_m = jnp.abs(out_m - ref_m)
    assert float(jnp.max(err_m)) < 1e-1, f"max abs err (masked): {float(jnp.max(err_m))}"
    assert float(jnp.mean(err_m)) < 2e-2, f"mean abs err (masked): {float(jnp.mean(err_m))}"

    print("KERNEL_OK")
</pallas_src>

<mosaic_0001>
module attributes {stable_mosaic.version = 11 : i64} {
  func.func @_ln_qkv_kernel(%arg0: i32, %arg1: i32, %arg2: memref<1x8x32xf32, #tpu.memory_space<vmem>>, %arg3: memref<1x32xf32, #tpu.memory_space<vmem>>, %arg4: memref<1x32xf32, #tpu.memory_space<vmem>>, %arg5: memref<32x32xbf16, #tpu.memory_space<vmem>>, %arg6: memref<1x32xf32, #tpu.memory_space<vmem>>, %arg7: memref<32x32xbf16, #tpu.memory_space<vmem>>, %arg8: memref<1x32xf32, #tpu.memory_space<vmem>>, %arg9: memref<32x32xbf16, #tpu.memory_space<vmem>>, %arg10: memref<1x32xf32, #tpu.memory_space<vmem>>, %arg11: memref<1x32xf32, #tpu.memory_space<vmem>>, %arg12: memref<1x32xf32, #tpu.memory_space<vmem>>, %arg13: memref<1x8x32xbf16, #tpu.memory_space<vmem>>, %arg14: memref<1x8x32xbf16, #tpu.memory_space<vmem>>, %arg15: memref<1x8x32xbf16, #tpu.memory_space<vmem>>, %arg16: memref<1x8x32xbf16, #tpu.memory_space<vmem>>) attributes {dimension_semantics = [#tpu.dimension_semantics<parallel>, #tpu.dimension_semantics<parallel>], iteration_bounds = array<i64: 2, 1>, scalar_prefetch = 0 : i64, scratch_operands = 0 : i64, tpu.core_type = #tpu.core_type<tc>, window_params = [{transform_indices = @transform_0, window_bounds = array<i64: 1, 8, 32>}, {pipeline_mode = #tpu.pipeline_mode<synchronous>, transform_indices = @transform_1, window_bounds = array<i64: 1, 32>}, {pipeline_mode = #tpu.pipeline_mode<synchronous>, transform_indices = @transform_2, window_bounds = array<i64: 1, 32>}, {pipeline_mode = #tpu.pipeline_mode<synchronous>, transform_indices = @transform_3, window_bounds = array<i64: 32, 32>}, {pipeline_mode = #tpu.pipeline_mode<synchronous>, transform_indices = @transform_4, window_bounds = array<i64: 1, 32>}, {pipeline_mode = #tpu.pipeline_mode<synchronous>, transform_indices = @transform_5, window_bounds = array<i64: 32, 32>}, {pipeline_mode = #tpu.pipeline_mode<synchronous>, transform_indices = @transform_6, window_bounds = array<i64: 1, 32>}, {pipeline_mode = #tpu.pipeline_mode<synchronous>, transform_indices = @transform_7, window_bounds = array<i64: 32, 32>}, {pipeline_mode = #tpu.pipeline_mode<synchronous>, transform_indices = @transform_8, window_bounds = array<i64: 1, 32>}, {pipeline_mode = #tpu.pipeline_mode<synchronous>, transform_indices = @transform_9, window_bounds = array<i64: 1, 32>}, {pipeline_mode = #tpu.pipeline_mode<synchronous>, transform_indices = @transform_10, window_bounds = array<i64: 1, 32>}, {transform_indices = @transform_11, window_bounds = array<i64: 1, 8, 32>}, {transform_indices = @transform_12, window_bounds = array<i64: 1, 8, 32>}, {transform_indices = @transform_13, window_bounds = array<i64: 1, 8, 32>}, {transform_indices = @transform_14, window_bounds = array<i64: 1, 8, 32>}]} {
    %c0 = arith.constant 0 : index
    %c0_0 = arith.constant 0 : index
    %c0_1 = arith.constant 0 : index
    %0 = vector.load %arg2[%c0, %c0_0, %c0_1] : memref<1x8x32xf32, #tpu.memory_space<vmem>>, vector<1x8x32xf32>
    %1 = vector.shape_cast %0 : vector<1x8x32xf32> to vector<8x32xf32>
    %cst = arith.constant dense<0.000000e+00> : vector<8xf32>
    %2 = vector.multi_reduction <add>, %1, %cst [1] : vector<8x32xf32> to vector<8xf32>
    %3 = vector.shape_cast %2 : vector<8xf32> to vector<8x1xf32>
    %cst_2 = arith.constant 3.200000e+01 : f32
    %4 = vector.broadcast %cst_2 : f32 to vector<8x1xf32>
    %5 = arith.divf %3, %4 : vector<8x1xf32>
    %6 = vector.broadcast %5 : vector<8x1xf32> to vector<8x32xf32>
    %7 = arith.subf %1, %6 : vector<8x32xf32>
    %8 = arith.mulf %7, %7 : vector<8x32xf32>
    %cst_3 = arith.constant dense<0.000000e+00> : vector<8xf32>
    %9 = vector.multi_reduction <add>, %8, %cst_3 [1] : vector<8x32xf32> to vector<8xf32>
    %10 = vector.shape_cast %9 : vector<8xf32> to vector<8x1xf32>
    %cst_4 = arith.constant 3.200000e+01 : f32
    %11 = vector.broadcast %cst_4 : f32 to vector<8x1xf32>
    %12 = arith.divf %10, %11 : vector<8x1xf32>
    %13 = vector.broadcast %5 : vector<8x1xf32> to vector<8x32xf32>
    %14 = arith.subf %1, %13 : vector<8x32xf32>
    %cst_5 = arith.constant 9.99999974E-6 : f32
    %15 = vector.broadcast %cst_5 : f32 to vector<8x1xf32>
    %16 = arith.addf %12, %15 : vector<8x1xf32>
    %17 = math.rsqrt %16 : vector<8x1xf32>
    %18 = vector.broadcast %17 : vector<8x1xf32> to vector<8x32xf32>
    %19 = arith.mulf %14, %18 : vector<8x32xf32>
    %c0_6 = arith.constant 0 : index
    %c0_7 = arith.constant 0 : index
    %20 = vector.load %arg3[%c0_6, %c0_7] : memref<1x32xf32, #tpu.memory_space<vmem>>, vector<1x32xf32>
    %21 = vector.broadcast %20 : vector<1x32xf32> to vector<8x32xf32>
    %22 = arith.mulf %19, %21 : vector<8x32xf32>
    %c0_8 = arith.constant 0 : index
    %c0_9 = arith.constant 0 : index
    %23 = vector.load %arg4[%c0_8, %c0_9] : memref<1x32xf32, #tpu.memory_space<vmem>>, vector<1x32xf32>
    %24 = vector.broadcast %23 : vector<1x32xf32> to vector<8x32xf32>
    %25 = arith.addf %22, %24 : vector<8x32xf32>
    %26 = arith.truncf %25 : vector<8x32xf32> to vector<8x32xbf16>
    %c0_10 = arith.constant 0 : index
    %c0_11 = arith.constant 0 : index
    %27 = vector.load %arg5[%c0_10, %c0_11] : memref<32x32xbf16, #tpu.memory_space<vmem>>, vector<32x32xbf16>
    %cst_12 = arith.constant dense<0.000000e+00> : vector<8x32xf32>
    %28 = tpu.matmul %26, %27, %cst_12 {dimension_numbers = #tpu.dot_dimension_numbers<[1], [0], [0], [1], [0, 0, 1, 1], [], []>} : vector<8x32xbf16>, vector<32x32xbf16>, vector<8x32xf32> -> vector<8x32xf32>
    %c0_13 = arith.constant 0 : index
    %c0_14 = arith.constant 0 : index
    %29 = vector.load %arg6[%c0_13, %c0_14] : memref<1x32xf32, #tpu.memory_space<vmem>>, vector<1x32xf32>
    %30 = vector.broadcast %29 : vector<1x32xf32> to vector<8x32xf32>
    %31 = arith.addf %28, %30 : vector<8x32xf32>
    %c0_15 = arith.constant 0 : index
    %c0_16 = arith.constant 0 : index
    %32 = vector.load %arg7[%c0_15, %c0_16] : memref<32x32xbf16, #tpu.memory_space<vmem>>, vector<32x32xbf16>
    %cst_17 = arith.constant dense<0.000000e+00> : vector<8x32xf32>
    %33 = tpu.matmul %26, %32, %cst_17 {dimension_numbers = #tpu.dot_dimension_numbers<[1], [0], [0], [1], [0, 0, 1, 1], [], []>} : vector<8x32xbf16>, vector<32x32xbf16>, vector<8x32xf32> -> vector<8x32xf32>
    %c0_18 = arith.constant 0 : index
    %c0_19 = arith.constant 0 : index
    %34 = vector.load %arg8[%c0_18, %c0_19] : memref<1x32xf32, #tpu.memory_space<vmem>>, vector<1x32xf32>
    %35 = vector.broadcast %34 : vector<1x32xf32> to vector<8x32xf32>
    %36 = arith.addf %33, %35 : vector<8x32xf32>
    %c0_20 = arith.constant 0 : index
    %c0_21 = arith.constant 0 : index
    %37 = vector.load %arg9[%c0_20, %c0_21] : memref<32x32xbf16, #tpu.memory_space<vmem>>, vector<32x32xbf16>
    %cst_22 = arith.constant dense<0.000000e+00> : vector<8x32xf32>
    %38 = tpu.matmul %26, %37, %cst_22 {dimension_numbers = #tpu.dot_dimension_numbers<[1], [0], [0], [1], [0, 0, 1, 1], [], []>} : vector<8x32xbf16>, vector<32x32xbf16>, vector<8x32xf32> -> vector<8x32xf32>
    %c0_23 = arith.constant 0 : index
    %c0_24 = arith.constant 0 : index
    %39 = vector.load %arg10[%c0_23, %c0_24] : memref<1x32xf32, #tpu.memory_space<vmem>>, vector<1x32xf32>
    %40 = vector.broadcast %39 : vector<1x32xf32> to vector<8x32xf32>
    %41 = arith.addf %38, %40 : vector<8x32xf32>
    %c0_25 = arith.constant 0 : index
    %c0_26 = arith.constant 0 : index
    %42 = vector.load %arg11[%c0_25, %c0_26] : memref<1x32xf32, #tpu.memory_space<vmem>>, vector<1x32xf32>
    %43 = vector.broadcast %42 : vector<1x32xf32> to vector<8x32xf32>
    %44 = arith.addf %31, %43 : vector<8x32xf32>
    %45 = arith.truncf %44 : vector<8x32xf32> to vector<8x32xbf16>
    %c0_27 = arith.constant 0 : index
    %c0_28 = arith.constant 0 : index
    %c0_29 = arith.constant 0 : index
    %46 = vector.load %arg13[%c0_27, %c0_28, %c0_29] : memref<1x8x32xbf16, #tpu.memory_space<vmem>>, vector<1x8x32xbf16>
    %47 = vector.shape_cast %46 : vector<1x8x32xbf16> to vector<8x32xbf16>
    %48 = vector.shape_cast %45 : vector<8x32xbf16> to vector<1x8x32xbf16>
    tpu.vector_store %arg13[%c0_27, %c0_28, %c0_29], %48 {strides = array<i32>} : memref<1x8x32xbf16, #tpu.memory_space<vmem>>, vector<1x8x32xbf16>,
    %c0_30 = arith.constant 0 : index
    %c0_31 = arith.constant 0 : index
    %49 = vector.load %arg12[%c0_30, %c0_31] : memref<1x32xf32, #tpu.memory_space<vmem>>, vector<1x32xf32>
    %50 = vector.broadcast %49 : vector<1x32xf32> to vector<8x32xf32>
    %51 = arith.addf %31, %50 : vector<8x32xf32>
    %52 = arith.truncf %51 : vector<8x32xf32> to vector<8x32xbf16>
    %c0_32 = arith.constant 0 : index
    %c0_33 = arith.constant 0 : index
    %c0_34 = arith.constant 0 : index
    %53 = vector.load %arg14[%c0_32, %c0_33, %c0_34] : memref<1x8x32xbf16, #tpu.memory_space<vmem>>, vector<1x8x32xbf16>
    %54 = vector.shape_cast %53 : vector<1x8x32xbf16> to vector<8x32xbf16>
    %55 = vector.shape_cast %52 : vector<8x32xbf16> to vector<1x8x32xbf16>
    tpu.vector_store %arg14[%c0_32, %c0_33, %c0_34], %55 {strides = array<i32>} : memref<1x8x32xbf16, #tpu.memory_space<vmem>>, vector<1x8x32xbf16>,
    %56 = arith.truncf %36 : vector<8x32xf32> to vector<8x32xbf16>
    %c0_35 = arith.constant 0 : index
    %c0_36 = arith.constant 0 : index
    %c0_37 = arith.constant 0 : index
    %57 = vector.load %arg15[%c0_35, %c0_36, %c0_37] : memref<1x8x32xbf16, #tpu.memory_space<vmem>>, vector<1x8x32xbf16>
    %58 = vector.shape_cast %57 : vector<1x8x32xbf16> to vector<8x32xbf16>
    %59 = vector.shape_cast %56 : vector<8x32xbf16> to vector<1x8x32xbf16>
    tpu.vector_store %arg15[%c0_35, %c0_36, %c0_37], %59 {strides = array<i32>} : memref<1x8x32xbf16, #tpu.memory_space<vmem>>, vector<1x8x32xbf16>,
    %60 = arith.truncf %41 : vector<8x32xf32> to vector<8x32xbf16>
    %c0_38 = arith.constant 0 : index
    %c0_39 = arith.constant 0 : index
    %c0_40 = arith.constant 0 : index
    %61 = vector.load %arg16[%c0_38, %c0_39, %c0_40] : memref<1x8x32xbf16, #tpu.memory_space<vmem>>, vector<1x8x32xbf16>
    %62 = vector.shape_cast %61 : vector<1x8x32xbf16> to vector<8x32xbf16>
    %63 = vector.shape_cast %60 : vector<8x32xbf16> to vector<1x8x32xbf16>
    tpu.vector_store %arg16[%c0_38, %c0_39, %c0_40], %63 {strides = array<i32>} : memref<1x8x32xbf16, #tpu.memory_space<vmem>>, vector<1x8x32xbf16>,
    return
  }
  func.func @transform_0(%arg0: i32, %arg1: i32) -> (i32, i32, i32) {
    %c0_i32 = arith.constant 0 : i32
    %c0_i32_0 = arith.constant 0 : i32
    return %arg0, %arg1, %c0_i32 : i32, i32, i32
  }
  func.func @transform_1(%arg0: i32, %arg1: i32) -> (i32, i32) {
    %c0_i32 = arith.constant 0 : i32
    %c0_i32_0 = arith.constant 0 : i32
    %c0_i32_1 = arith.constant 0 : i32
    return %c0_i32, %c0_i32_0 : i32, i32
  }
  func.func @transform_2(%arg0: i32, %arg1: i32) -> (i32, i32) {
    %c0_i32 = arith.constant 0 : i32
    %c0_i32_0 = arith.constant 0 : i32
    %c0_i32_1 = arith.constant 0 : i32
    return %c0_i32, %c0_i32_0 : i32, i32
  }
  func.func @transform_3(%arg0: i32, %arg1: i32) -> (i32, i32) {
    %c0_i32 = arith.constant 0 : i32
    %c0_i32_0 = arith.constant 0 : i32
    %c0_i32_1 = arith.constant 0 : i32
    return %c0_i32, %c0_i32_0 : i32, i32
  }
  func.func @transform_4(%arg0: i32, %arg1: i32) -> (i32, i32) {
    %c0_i32 = arith.constant 0 : i32
    %c0_i32_0 = arith.constant 0 : i32
    %c0_i32_1 = arith.constant 0 : i32
    return %c0_i32, %c0_i32_0 : i32, i32
  }
  func.func @transform_5(%arg0: i32, %arg1: i32) -> (i32, i32) {
    %c0_i32 = arith.constant 0 : i32
    %c0_i32_0 = arith.constant 0 : i32
    %c0_i32_1 = arith.constant 0 : i32
    return %c0_i32, %c0_i32_0 : i32, i32
  }
  func.func @transform_6(%arg0: i32, %arg1: i32) -> (i32, i32) {
    %c0_i32 = arith.constant 0 : i32
    %c0_i32_0 = arith.constant 0 : i32
    %c0_i32_1 = arith.constant 0 : i32
    return %c0_i32, %c0_i32_0 : i32, i32
  }
  func.func @transform_7(%arg0: i32, %arg1: i32) -> (i32, i32) {
    %c0_i32 = arith.constant 0 : i32
    %c0_i32_0 = arith.constant 0 : i32
    %c0_i32_1 = arith.constant 0 : i32
    return %c0_i32, %c0_i32_0 : i32, i32
  }
  func.func @transform_8(%arg0: i32, %arg1: i32) -> (i32, i32) {
    %c0_i32 = arith.constant 0 : i32
    %c0_i32_0 = arith.constant 0 : i32
    %c0_i32_1 = arith.constant 0 : i32
    return %c0_i32, %c0_i32_0 : i32, i32
  }
  func.func @transform_9(%arg0: i32, %arg1: i32) -> (i32, i32) {
    %c0_i32 = arith.constant 0 : i32
    %c0_i32_0 = arith.constant 0 : i32
    %c0_i32_1 = arith.constant 0 : i32
    return %c0_i32, %c0_i32_0 : i32, i32
  }
  func.func @transform_10(%arg0: i32, %arg1: i32) -> (i32, i32) {
    %c0_i32 = arith.constant 0 : i32
    %c0_i32_0 = arith.constant 0 : i32
    %c0_i32_1 = arith.constant 0 : i32
    return %c0_i32, %c0_i32_0 : i32, i32
  }
  func.func @transform_11(%arg0: i32, %arg1: i32) -> (i32, i32, i32) {
    %c0_i32 = arith.constant 0 : i32
    %c0_i32_0 = arith.constant 0 : i32
    return %arg0, %arg1, %c0_i32 : i32, i32, i32
  }
  func.func @transform_12(%arg0: i32, %arg1: i32) -> (i32, i32, i32) {
    %c0_i32 = arith.constant 0 : i32
    %c0_i32_0 = arith.constant 0 : i32
    return %arg0, %arg1, %c0_i32 : i32, i32, i32
  }
  func.func @transform_13(%arg0: i32, %arg1: i32) -> (i32, i32, i32) {
    %c0_i32 = arith.constant 0 : i32
    %c0_i32_0 = arith.constant 0 : i32
    return %arg0, %arg1, %c0_i32 : i32, i32, i32
  }
  func.func @transform_14(%arg0: i32, %arg1: i32) -> (i32, i32, i32) {
    %c0_i32 = arith.constant 0 : i32
    %c0_i32_0 = arith.constant 0 : i32
    return %arg0, %arg1, %c0_i32 : i32, i32, i32
  }
}

module attributes {stable_mosaic.version = 11 : i64} {
  func.func @_ln_qkv_kernel(%arg0: i32, %arg1: i32, %arg2: memref<1x8x32xf32, #tpu.memory_space<vmem>>, %arg3: memref<1x32xf32, #tpu.memory_space<vmem>>, %arg4: memref<1x32xf32, #tpu.memory_space<vmem>>, %arg5: memref<32x32xbf16, #tpu.memory_space<vmem>>, %arg6: memref<1x32xf32, #tpu.memory_space<vmem>>, %arg7: memref<32x32xbf16, #tpu.memory_space<vmem>>, %arg8: memref<1x32xf32, #tpu.memory_space<vmem>>, %arg9: memref<32x32xbf16, #tpu.memory_space<vmem>>, %arg10: memref<1x32xf32, #tpu.memory_space<vmem>>, %arg11: memref<1x32xf32, #tpu.memory_space<vmem>>, %arg12: memref<1x32xf32, #tpu.memory_space<vmem>>, %arg13: memref<1x8x32xbf16, #tpu.memory_space<vmem>>, %arg14: memref<1x8x32xbf16, #tpu.memory_space<vmem>>, %arg15: memref<1x8x32xbf16, #tpu.memory_space<vmem>>, %arg16: memref<1x8x32xbf16, #tpu.memory_space<vmem>>) attributes {dimension_semantics = [#tpu.dimension_semantics<parallel>, #tpu.dimension_semantics<parallel>], iteration_bounds = array<i64: 2, 1>, scalar_prefetch = 0 : i64, scratch_operands = 0 : i64, tpu.core_type = #tpu.core_type<tc>, window_params = [{transform_indices = @transform_0, window_bounds = array<i64: 1, 8, 32>}, {pipeline_mode = #tpu.pipeline_mode<synchronous>, transform_indices = @transform_1, window_bounds = array<i64: 1, 32>}, {pipeline_mode = #tpu.pipeline_mode<synchronous>, transform_indices = @transform_2, window_bounds = array<i64: 1, 32>}, {pipeline_mode = #tpu.pipeline_mode<synchronous>, transform_indices = @transform_3, window_bounds = array<i64: 32, 32>}, {pipeline_mode = #tpu.pipeline_mode<synchronous>, transform_indices = @transform_4, window_bounds = array<i64: 1, 32>}, {pipeline_mode = #tpu.pipeline_mode<synchronous>, transform_indices = @transform_5, window_bounds = array<i64: 32, 32>}, {pipeline_mode = #tpu.pipeline_mode<synchronous>, transform_indices = @transform_6, window_bounds = array<i64: 1, 32>}, {pipeline_mode = #tpu.pipeline_mode<synchronous>, transform_indices = @transform_7, window_bounds = array<i64: 32, 32>}, {pipeline_mode = #tpu.pipeline_mode<synchronous>, transform_indices = @transform_8, window_bounds = array<i64: 1, 32>}, {pipeline_mode = #tpu.pipeline_mode<synchronous>, transform_indices = @transform_9, window_bounds = array<i64: 1, 32>}, {pipeline_mode = #tpu.pipeline_mode<synchronous>, transform_indices = @transform_10, window_bounds = array<i64: 1, 32>}, {transform_indices = @transform_11, window_bounds = array<i64: 1, 8, 32>}, {transform_indices = @transform_12, window_bounds = array<i64: 1, 8, 32>}, {transform_indices = @transform_13, window_bounds = array<i64: 1, 8, 32>}, {transform_indices = @transform_14, window_bounds = array<i64: 1, 8, 32>}]} {
    %c0 = arith.constant 0 : index
    %c0_0 = arith.constant 0 : index
    %c0_1 = arith.constant 0 : index
    %0 = vector.load %arg2[%c0, %c0_0, %c0_1] : memref<1x8x32xf32, #tpu.memory_space<vmem>>, vector<1x8x32xf32>
    %1 = vector.shape_cast %0 : vector<1x8x32xf32> to vector<8x32xf32>
    %cst = arith.constant dense<0.000000e+00> : vector<8xf32>
    %2 = vector.multi_reduction <add>, %1, %cst [1] : vector<8x32xf32> to vector<8xf32>
    %3 = vector.shape_cast %2 : vector<8xf32> to vector<8x1xf32>
    %cst_2 = arith.constant 3.200000e+01 : f32
    %4 = vector.broadcast %cst_2 : f32 to vector<8x1xf32>
    %5 = arith.divf %3, %4 : vector<8x1xf32>
    %6 = vector.broadcast %5 : vector<8x1xf32> to vector<8x32xf32>
    %7 = arith.subf %1, %6 : vector<8x32xf32>
    %8 = arith.mulf %7, %7 : vector<8x32xf32>
    %cst_3 = arith.constant dense<0.000000e+00> : vector<8xf32>
    %9 = vector.multi_reduction <add>, %8, %cst_3 [1] : vector<8x32xf32> to vector<8xf32>
    %10 = vector.shape_cast %9 : vector<8xf32> to vector<8x1xf32>
    %cst_4 = arith.constant 3.200000e+01 : f32
    %11 = vector.broadcast %cst_4 : f32 to vector<8x1xf32>
    %12 = arith.divf %10, %11 : vector<8x1xf32>
    %13 = vector.broadcast %5 : vector<8x1xf32> to vector<8x32xf32>
    %14 = arith.subf %1, %13 : vector<8x32xf32>
    %cst_5 = arith.constant 9.99999974E-6 : f32
    %15 = vector.broadcast %cst_5 : f32 to vector<8x1xf32>
    %16 = arith.addf %12, %15 : vector<8x1xf32>
    %17 = math.rsqrt %16 : vector<8x1xf32>
    %18 = vector.broadcast %17 : vector<8x1xf32> to vector<8x32xf32>
    %19 = arith.mulf %14, %18 : vector<8x32xf32>
    %c0_6 = arith.constant 0 : index
    %c0_7 = arith.constant 0 : index
    %20 = vector.load %arg3[%c0_6, %c0_7] : memref<1x32xf32, #tpu.memory_space<vmem>>, vector<1x32xf32>
    %21 = vector.broadcast %20 : vector<1x32xf32> to vector<8x32xf32>
    %22 = arith.mulf %19, %21 : vector<8x32xf32>
    %c0_8 = arith.constant 0 : index
    %c0_9 = arith.constant 0 : index
    %23 = vector.load %arg4[%c0_8, %c0_9] : memref<1x32xf32, #tpu.memory_space<vmem>>, vector<1x32xf32>
    %24 = vector.broadcast %23 : vector<1x32xf32> to vector<8x32xf32>
    %25 = arith.addf %22, %24 : vector<8x32xf32>
    %26 = arith.truncf %25 : vector<8x32xf32> to vector<8x32xbf16>
    %c0_10 = arith.constant 0 : index
    %c0_11 = arith.constant 0 : index
    %27 = vector.load %arg5[%c0_10, %c0_11] : memref<32x32xbf16, #tpu.memory_space<vmem>>, vector<32x32xbf16>
    %cst_12 = arith.constant dense<0.000000e+00> : vector<8x32xf32>
    %28 = tpu.matmul %26, %27, %cst_12 {dimension_numbers = #tpu.dot_dimension_numbers<[1], [0], [0], [1], [0, 0, 1, 1], [], []>} : vector<8x32xbf16>, vector<32x32xbf16>, vector<8x32xf32> -> vector<8x32xf32>
    %c0_13 = arith.constant 0 : index
    %c0_14 = arith.constant 0 : index
    %29 = vector.load %arg6[%c0_13, %c0_14] : memref<1x32xf32, #tpu.memory_space<vmem>>, vector<1x32xf32>
    %30 = vector.broadcast %29 : vector<1x32xf32> to vector<8x32xf32>
    %31 = arith.addf %28, %30 : vector<8x32xf32>
    %c0_15 = arith.constant 0 : index
    %c0_16 = arith.constant 0 : index
    %32 = vector.load %arg7[%c0_15, %c0_16] : memref<32x32xbf16, #tpu.memory_space<vmem>>, vector<32x32xbf16>
    %cst_17 = arith.constant dense<0.000000e+00> : vector<8x32xf32>
    %33 = tpu.matmul %26, %32, %cst_17 {dimension_numbers = #tpu.dot_dimension_numbers<[1], [0], [0], [1], [0, 0, 1, 1], [], []>} : vector<8x32xbf16>, vector<32x32xbf16>, vector<8x32xf32> -> vector<8x32xf32>
    %c0_18 = arith.constant 0 : index
    %c0_19 = arith.constant 0 : index
    %34 = vector.load %arg8[%c0_18, %c0_19] : memref<1x32xf32, #tpu.memory_space<vmem>>, vector<1x32xf32>
    %35 = vector.broadcast %34 : vector<1x32xf32> to vector<8x32xf32>
    %36 = arith.addf %33, %35 : vector<8x32xf32>
    %c0_20 = arith.constant 0 : index
    %c0_21 = arith.constant 0 : index
    %37 = vector.load %arg9[%c0_20, %c0_21] : memref<32x32xbf16, #tpu.memory_space<vmem>>, vector<32x32xbf16>
    %cst_22 = arith.constant dense<0.000000e+00> : vector<8x32xf32>
    %38 = tpu.matmul %26, %37, %cst_22 {dimension_numbers = #tpu.dot_dimension_numbers<[1], [0], [0], [1], [0, 0, 1, 1], [], []>} : vector<8x32xbf16>, vector<32x32xbf16>, vector<8x32xf32> -> vector<8x32xf32>
    %c0_23 = arith.constant 0 : index
    %c0_24 = arith.constant 0 : index
    %39 = vector.load %arg10[%c0_23, %c0_24] : memref<1x32xf32, #tpu.memory_space<vmem>>, vector<1x32xf32>
    %40 = vector.broadcast %39 : vector<1x32xf32> to vector<8x32xf32>
    %41 = arith.addf %38, %40 : vector<8x32xf32>
    %c0_25 = arith.constant 0 : index
    %c0_26 = arith.constant 0 : index
    %42 = vector.load %arg11[%c0_25, %c0_26] : memref<1x32xf32, #tpu.memory_space<vmem>>, vector<1x32xf32>
    %43 = vector.broadcast %42 : vector<1x32xf32> to vector<8x32xf32>
    %44 = arith.addf %31, %43 : vector<8x32xf32>
    %45 = arith.truncf %44 : vector<8x32xf32> to vector<8x32xbf16>
    %c0_27 = arith.constant 0 : index
    %c0_28 = arith.constant 0 : index
    %c0_29 = arith.constant 0 : index
    %46 = vector.load %arg13[%c0_27, %c0_28, %c0_29] : memref<1x8x32xbf16, #tpu.memory_space<vmem>>, vector<1x8x32xbf16>
    %47 = vector.shape_cast %46 : vector<1x8x32xbf16> to vector<8x32xbf16>
    %48 = vector.shape_cast %45 : vector<8x32xbf16> to vector<1x8x32xbf16>
    tpu.vector_store %arg13[%c0_27, %c0_28, %c0_29], %48 {strides = array<i32>} : memref<1x8x32xbf16, #tpu.memory_space<vmem>>, vector<1x8x32xbf16>,
    %c0_30 = arith.constant 0 : index
    %c0_31 = arith.constant 0 : index
    %49 = vector.load %arg12[%c0_30, %c0_31] : memref<1x32xf32, #tpu.memory_space<vmem>>, vector<1x32xf32>
    %50 = vector.broadcast %49 : vector<1x32xf32> to vector<8x32xf32>
    %51 = arith.addf %31, %50 : vector<8x32xf32>
    %52 = arith.truncf %51 : vector<8x32xf32> to vector<8x32xbf16>
    %c0_32 = arith.constant 0 : index
    %c0_33 = arith.constant 0 : index
    %c0_34 = arith.constant 0 : index
    %53 = vector.load %arg14[%c0_32, %c0_33, %c0_34] : memref<1x8x32xbf16, #tpu.memory_space<vmem>>, vector<1x8x32xbf16>
    %54 = vector.shape_cast %53 : vector<1x8x32xbf16> to vector<8x32xbf16>
    %55 = vector.shape_cast %52 : vector<8x32xbf16> to vector<1x8x32xbf16>
    tpu.vector_store %arg14[%c0_32, %c0_33, %c0_34], %55 {strides = array<i32>} : memref<1x8x32xbf16, #tpu.memory_space<vmem>>, vector<1x8x32xbf16>,
    %56 = arith.truncf %36 : vector<8x32xf32> to vector<8x32xbf16>
    %c0_35 = arith.constant 0 : index
    %c0_36 = arith.constant 0 : index
    %c0_37 = arith.constant 0 : index
    %57 = vector.load %arg15[%c0_35, %c0_36, %c0_37] : memref<1x8x32xbf16, #tpu.memory_space<vmem>>, vector<1x8x32xbf16>
    %58 = vector.shape_cast %57 : vector<1x8x32xbf16> to vector<8x32xbf16>
    %59 = vector.shape_cast %56 : vector<8x32xbf16> to vector<1x8x32xbf16>
    tpu.vector_store %arg15[%c0_35, %c0_36, %c0_37], %59 {strides = array<i32>} : memref<1x8x32xbf16, #tpu.memory_space<vmem>>, vector<1x8x32xbf16>,
    %60 = arith.truncf %41 : vector<8x32xf32> to vector<8x32xbf16>
    %c0_38 = arith.constant 0 : index
    %c0_39 = arith.constant 0 : index
    %c0_40 = arith.constant 0 : index
    %61 = vector.load %arg16[%c0_38, %c0_39, %c0_40] : memref<1x8x32xbf16, #tpu.memory_space<vmem>>, vector<1x8x32xbf16>
    %62 = vector.shape_cast %61 : vector<1x8x32xbf16> to vector<8x32xbf16>
    %63 = vector.shape_cast %60 : vector<8x32xbf16> to vector<1x8x32xbf16>
    tpu.vector_store %arg16[%c0_38, %c0_39, %c0_40], %63 {strides = array<i32>} : memref<1x8x32xbf16, #tpu.memory_space<vmem>>, vector<1x8x32xbf16>,
    return
  }
  func.func @transform_0(%arg0: i32, %arg1: i32) -> (i32, i32, i32) {
    %c0_i32 = arith.constant 0 : i32
    %c0_i32_0 = arith.constant 0 : i32
    return %arg0, %arg1, %c0_i32 : i32, i32, i32
  }
  func.func @transform_1(%arg0: i32, %arg1: i32) -> (i32, i32) {
    %c0_i32 = arith.constant 0 : i32
    %c0_i32_0 = arith.constant 0 : i32
    %c0_i32_1 = arith.constant 0 : i32
    return %c0_i32, %c0_i32_0 : i32, i32
  }
  func.func @transform_2(%arg0: i32, %arg1: i32) -> (i32, i32) {
    %c0_i32 = arith.constant 0 : i32
    %c0_i32_0 = arith.constant 0 : i32
    %c0_i32_1 = arith.constant 0 : i32
    return %c0_i32, %c0_i32_0 : i32, i32
  }
  func.func @transform_3(%arg0: i32, %arg1: i32) -> (i32, i32) {
    %c0_i32 = arith.constant 0 : i32
    %c0_i32_0 = arith.constant 0 : i32
    %c0_i32_1 = arith.constant 0 : i32
    return %c0_i32, %c0_i32_0 : i32, i32
  }
  func.func @transform_4(%arg0: i32, %arg1: i32) -> (i32, i32) {
    %c0_i32 = arith.constant 0 : i32
    %c0_i32_0 = arith.constant 0 : i32
    %c0_i32_1 = arith.constant 0 : i32
    return %c0_i32, %c0_i32_0 : i32, i32
  }
  func.func @transform_5(%arg0: i32, %arg1: i32) -> (i32, i32) {
    %c0_i32 = arith.constant 0 : i32
    %c0_i32_0 = arith.constant 0 : i32
    %c0_i32_1 = arith.constant 0 : i32
    return %c0_i32, %c0_i32_0 : i32, i32
  }
  func.func @transform_6(%arg0: i32, %arg1: i32) -> (i32, i32) {
    %c0_i32 = arith.constant 0 : i32
    %c0_i32_0 = arith.constant 0 : i32
    %c0_i32_1 = arith.constant 0 : i32
    return %c0_i32, %c0_i32_0 : i32, i32
  }
  func.func @transform_7(%arg0: i32, %arg1: i32) -> (i32, i32) {
    %c0_i32 = arith.constant 0 : i32
    %c0_i32_0 = arith.constant 0 : i32
    %c0_i32_1 = arith.constant 0 : i32
    return %c0_i32, %c0_i32_0 : i32, i32
  }
  func.func @transform_8(%arg0: i32, %arg1: i32) -> (i32, i32) {
    %c0_i32 = arith.constant 0 : i32
    %c0_i32_0 = arith.constant 0 : i32
    %c0_i32_1 = arith.constant 0 : i32
    return %c0_i32, %c0_i32_0 : i32, i32
  }
  func.func @transform_9(%arg0: i32, %arg1: i32) -> (i32, i32) {
    %c0_i32 = arith.constant 0 : i32
    %c0_i32_0 = arith.constant 0 : i32
    %c0_i32_1 = arith.constant 0 : i32
    return %c0_i32, %c0_i32_0 : i32, i32
  }
  func.func @transform_10(%arg0: i32, %arg1: i32) -> (i32, i32) {
    %c0_i32 = arith.constant 0 : i32
    %c0_i32_0 = arith.constant 0 : i32
    %c0_i32_1 = arith.constant 0 : i32
    return %c0_i32, %c0_i32_0 : i32, i32
  }
  func.func @transform_11(%arg0: i32, %arg1: i32) -> (i32, i32, i32) {
    %c0_i32 = arith.constant 0 : i32
    %c0_i32_0 = arith.constant 0 : i32
    return %arg0, %arg1, %c0_i32 : i32, i32, i32
  }
  func.func @transform_12(%arg0: i32, %arg1: i32) -> (i32, i32, i32) {
    %c0_i32 = arith.constant 0 : i32
    %c0_i32_0 = arith.constant 0 : i32
    return %arg0, %arg1, %c0_i32 : i32, i32, i32
  }
  func.func @transform_13(%arg0: i32, %arg1: i32) -> (i32, i32, i32) {
    %c0_i32 = arith.constant 0 : i32
    %c0_i32_0 = arith.constant 0 : i32
    return %arg0, %arg1, %c0_i32 : i32, i32, i32
  }
  func.func @transform_14(%arg0: i32, %arg1: i32) -> (i32, i32, i32) {
    %c0_i32 = arith.constant 0 : i32
    %c0_i32_0 = arith.constant 0 : i32
    return %arg0, %arg1, %c0_i32 : i32, i32, i32
  }
}

</mosaic_0001>

<llo_original>
// kernel: tpu_custom_call.1
$region0: #{tpu_custom_call.1}
  #allocation0 [shape = 'u32[]', space=smem, size = 0x4, offset = 0x4, fixed_abs, tag = 'smem constant byte address 0x4 - core index']
  #allocation1 [shape = 'u32[144,128]{1,0:T(1,128)}', space=vmem, size = 0x12000, scoped, tag = 'internal scratch']
  %s0 = inlined_call_operand.hbm [shape: f32[2,8,32], index: 0, kind: input, shape index: {}]
  %s1 = inlined_call_operand.vmem [shape: f32[1,32], index: 1, kind: input, shape index: {}]
  %s2 = inlined_call_operand.vmem [shape: f32[1,32], index: 2, kind: input, shape index: {}]
  %s3 = inlined_call_operand.hbm [shape: bf16[32,32], index: 3, kind: input, shape index: {}]
  %s4 = inlined_call_operand.hbm [shape: f32[1,32], index: 4, kind: input, shape index: {}]
  %s5 = inlined_call_operand.vmem [shape: bf16[32,32], index: 5, kind: input, shape index: {}]
  %s6 = inlined_call_operand.vmem [shape: f32[1,32], index: 6, kind: input, shape index: {}]
  %s7 = inlined_call_operand.hbm [shape: bf16[32,32], index: 7, kind: input, shape index: {}]
  %s8 = inlined_call_operand.vmem [shape: f32[1,32], index: 8, kind: input, shape index: {}]
  %s9 = inlined_call_operand.vmem [shape: f32[1,32], index: 9, kind: input, shape index: {}]
  %s10 = inlined_call_operand.vmem [shape: f32[1,32], index: 10, kind: input, shape index: {}]
  %s11 = inlined_call_operand.hbm [shape: bf16[2,8,32], index: 11, kind: output, shape index: {0}]
  %s12 = inlined_call_operand.hbm [shape: bf16[2,8,32], index: 12, kind: output, shape index: {1}]
  %s13 = inlined_call_operand.hbm [shape: bf16[2,8,32], index: 13, kind: output, shape index: {2}]
  %s14 = inlined_call_operand.hbm [shape: bf16[2,8,32], index: 14, kind: output, shape index: {3}]
  %15 = xla_tuple %s11, %s12, %s13, %s14
  %s16 = sld [smem:[#allocation0]]
  $region117: #{tpu_custom_call.1} parent=0
    _
  %s18 = ssub.s32 1, %s16
  %s19 = scalar_select 0, %s18, %s16
  $region1: #{tpu_custom_call.1} parent=0
    #allocation2 [shape = 'u8[8192]{0}', space=vmem, size = 0x2000, scoped, tag = 'input window, operand 0']
    #allocation3 [shape = 's32[2]{0}', space=sflag, size = 0x8, scoped, tag = 'scoped memory for tpu_custom_call.1']
    #allocation4 [shape = 's32[2]{0}', space=sflag, size = 0x8, scoped, tag = 'scoped memory for tpu_custom_call.1']
    #allocation5 [shape = 'u8[8192]{0}', space=vmem, size = 0x2000, scoped, tag = 'input window, operand 3, single buffered']
    #allocation6 [shape = 's32[1]{0}', space=sflag, size = 0x4, scoped, tag = 'scoped memory for tpu_custom_call.1']
    #allocation7 [shape = 'u8[512]{0}', space=vmem, size = 0x400, scoped, tag = 'input window, operand 4, single buffered']
    #allocation8 [shape = 'u8[8192]{0}', space=vmem, size = 0x2000, scoped, tag = 'input window, operand 7, single buffered']
    #allocation9 [shape = 's32[1]{0}', space=sflag, size = 0x4, scoped, tag = 'scoped memory for tpu_custom_call.1']
    #allocation10 [shape = 'u8[4096]{0}', space=vmem, size = 0x1000, scoped, tag = 'output window, operand 0']
    #allocation11 [shape = 'u8[4096]{0}', space=vmem, size = 0x1000, scoped, tag = 'output window, operand 1']
    #allocation12 [shape = 's32[2]{0}', space=sflag, size = 0x8, scoped, tag = 'scoped memory for tpu_custom_call.1']
    #allocation13 [shape = 'u8[4096]{0}', space=vmem, size = 0x1000, scoped, tag = 'output window, operand 2']
    #allocation14 [shape = 'u8[4096]{0}', space=vmem, size = 0x1000, scoped, tag = 'output window, operand 3']
    #allocation15 [shape = 's32[2]{0}', space=sflag, size = 0x8, scoped, tag = 'scoped memory for tpu_custom_call.1']
    %20 = vsyncpa [#allocation3], 0
    %s21 = scalar_lea.sflag [#allocation3], 1
    %22 = vsyncpa %s21, 0
    %23 = vsyncpa [#allocation6], 0
    %24 = vsyncpa [#allocation9], 0
    %25 = vsyncpa [#allocation4], 0
    %s26 = scalar_lea.sflag [#allocation4], 1
    %27 = vsyncpa %s26, 0
    %28 = vsyncpa [#allocation12], 0
    %s29 = scalar_lea.sflag [#allocation12], 1
    %30 = vsyncpa %s29, 0
    %31 = vsyncpa [#allocation15], 0
    %s32 = scalar_lea.sflag [#allocation15], 1
    %33 = vsyncpa %s32, 0
    loop: start=0, step=1, limit=4
    $region2: #{tpu_custom_call.1} parent=1 // loop_pre_header
      _
    $region3: #{tpu_custom_call.1} parent=1 // loop_header
      %s35 = sphi 0, %s39
      %p36 = scmp.ge.s32.totalorder %s35, 4
      %s42 = sphi 0, %s54
      %s43 = sphi 0, %s50
      %s44 = sphi 0, %s42
      %s45 = sphi 0, %s43
      %s46 = sphi 0, %s44
      %s47 = sphi 0, %s45
      %s59 = sphi 0, %s61
      %s62 = sphi 0, %s59
      %s63 = sphi 0, %s62
      %s79 = sphi 0, %s63
      %s83 = sphi 0, %s83
      %s85 = sphi 0, %s83
      %s86 = sphi 0, %s85
      %s100 = sphi 0, %s86
      %s104 = sphi 0, %s104
      %s106 = sphi 0, %s104
      %s107 = sphi 0, %s106
      %s121 = sphi 0, %s107
      %s125 = sphi 0, %s125
      %s127 = sphi 0, %s125
      %s128 = sphi 0, %s127
      %s142 = sphi 0, %s128
      %s146 = sphi 0, %s146
      %s148 = sphi 0, %s146
      %s149 = sphi 0, %s148
      %s163 = sphi 0, %s149
      %s167 = sphi 0, %s167
      %s169 = sphi 0, %s167
      %s170 = sphi 0, %s169
      %s184 = sphi 0, %s170
      %s188 = sphi 0, %s188
      %s190 = sphi 0, %s188
      %s191 = sphi 0, %s190
      %s205 = sphi 0, %s191
      %s209 = sphi 0, %s209
      %s211 = sphi 0, %s209
      %s212 = sphi 0, %s211
      %s226 = sphi 0, %s212
      %s230 = sphi 0, %s230
      %s232 = sphi 0, %s230
      %s233 = sphi 0, %s232
      %s247 = sphi 0, %s233
      %s251 = sphi 0, %s251
      %s253 = sphi 0, %s251
      %s254 = sphi 0, %s253
      %s268 = sphi 0, %s254
      %s272 = sphi 0, %s272
      %s274 = sphi 0, %s272
      %s275 = sphi 0, %s274
      %s289 = sphi 0, %s275
      %s297 = sphi 0, %s299
      %s300 = sphi 0, %s297
      %s301 = sphi 0, %s300
      %s317 = sphi 0, %s301
      %s325 = sphi 0, %s327
      %s328 = sphi 0, %s325
      %s329 = sphi 0, %s328
      %s345 = sphi 0, %s329
      %s353 = sphi 0, %s355
      %s356 = sphi 0, %s353
      %s357 = sphi 0, %s356
      %s373 = sphi 0, %s357
      %s381 = sphi 0, %s383
      %s384 = sphi 0, %s381
      %s385 = sphi 0, %s384
      %s401 = sphi 0, %s385
    $region4: #{tpu_custom_call.1} parent=1 // loop_header_branch
      %38 = sbr.rel (%p36) target = $region8
    $region5: #{tpu_custom_call.1} parent=1 // loop_body
      %s40 = ssub.s32 %s35, 1
      %s41 = ssub.s32 %s35, 2
      %s48 = sadd.s32 1, %s43
      %p49 = scmp.ge.s32.totalorder %s48, 1
      %s50 = scalar_select %p49, 0, %s48
      %s51 = sadd.s32 1, %s42
      %s52 = scalar_select %p49, %s51, %s42
      %p53 = scmp.ge.s32.totalorder %s52, 2
      %s54 = scalar_select %p53, 0, %s52
      %s55 = ssub.s32 %s42, %s54
      %s56 = ssub.s32 %s43, %s50
      %s57 = sor.u32 %s55, %s56
      %p58 = scmp.eq.s32.totalorder %s57, 0
      %s60 = sadd.s32 %s59, 1
      %s61 = scalar_select %p58, %s59, %s60
      %p64 = pneg %p58
      %p65 = scmp.eq.s32.totalorder %s35, 1
      %p66 = por %p64, %p65
      %p67 = scmp.ne.s32.totalorder %s59, %s62
      %p68 = scmp.eq.s32.totalorder %s35, 0
      %p69 = por %p67, %p68
      %p70 = scmp.ne.s32.totalorder %s59, %s62
      %p71 = scmp.eq.s32.totalorder %s40, 1
      %p72 = por %p70, %p71
      %p73 = scmp.ne.s32.totalorder %s62, %s63
      %p74 = scmp.eq.s32.totalorder %s40, 0
      %p75 = por %p73, %p74
      %p76 = scmp.ne.s32.totalorder %s62, %s63
      %p77 = scmp.eq.s32.totalorder %s41, 1
      %p78 = por %p76, %p77
      %p80 = scmp.ne.s32.totalorder %s63, %s79
      %p81 = scmp.eq.s32.totalorder %s41, 0
      %p82 = por %p80, %p81
      %s84 = sadd.s32 %s83, 1
      %p87 = scmp.eq.s32.totalorder %s35, 1
      %p88 = scmp.ne.s32.totalorder %s83, %s85
      %p89 = scmp.eq.s32.totalorder %s35, 0
      %p90 = por %p88, %p89
      %p91 = scmp.ne.s32.totalorder %s83, %s85
      %p92 = scmp.eq.s32.totalorder %s40, 1
      %p93 = por %p91, %p92
      %p94 = scmp.ne.s32.totalorder %s85, %s86
      %p95 = scmp.eq.s32.totalorder %s40, 0
      %p96 = por %p94, %p95
      %p97 = scmp.ne.s32.totalorder %s85, %s86
      %p98 = scmp.eq.s32.totalorder %s41, 1
      %p99 = por %p97, %p98
      %p101 = scmp.ne.s32.totalorder %s86, %s100
      %p102 = scmp.eq.s32.totalorder %s41, 0
      %p103 = por %p101, %p102
      %s105 = sadd.s32 %s104, 1
      %p108 = scmp.eq.s32.totalorder %s35, 1
      %p109 = scmp.ne.s32.totalorder %s104, %s106
      %p110 = scmp.eq.s32.totalorder %s35, 0
      %p111 = por %p109, %p110
      %p112 = scmp.ne.s32.totalorder %s104, %s106
      %p113 = scmp.eq.s32.totalorder %s40, 1
      %p114 = por %p112, %p113
      %p115 = scmp.ne.s32.totalorder %s106, %s107
      %p116 = scmp.eq.s32.totalorder %s40, 0
      %p117 = por %p115, %p116
      %p118 = scmp.ne.s32.totalorder %s106, %s107
      %p119 = scmp.eq.s32.totalorder %s41, 1
      %p120 = por %p118, %p119
      %p122 = scmp.ne.s32.totalorder %s107, %s121
      %p123 = scmp.eq.s32.totalorder %s41, 0
      %p124 = por %p122, %p123
      %s126 = sadd.s32 %s125, 1
      %p129 = scmp.eq.s32.totalorder %s35, 1
      %p130 = scmp.ne.s32.totalorder %s125, %s127
      %p131 = scmp.eq.s32.totalorder %s35, 0
      %p132 = por %p130, %p131
      %p133 = scmp.ne.s32.totalorder %s125, %s127
      %p134 = scmp.eq.s32.totalorder %s40, 1
      %p135 = por %p133, %p134
      %p136 = scmp.ne.s32.totalorder %s127, %s128
      %p137 = scmp.eq.s32.totalorder %s40, 0
      %p138 = por %p136, %p137
      %p139 = scmp.ne.s32.totalorder %s127, %s128
      %p140 = scmp.eq.s32.totalorder %s41, 1
      %p141 = por %p139, %p140
      %p143 = scmp.ne.s32.totalorder %s128, %s142
      %p144 = scmp.eq.s32.totalorder %s41, 0
      %p145 = por %p143, %p144
      %s147 = sadd.s32 %s146, 1
      %p150 = scmp.eq.s32.totalorder %s35, 1
      %p151 = scmp.ne.s32.totalorder %s146, %s148
      %p152 = scmp.eq.s32.totalorder %s35, 0
      %p153 = por %p151, %p152
      %p154 = scmp.ne.s32.totalorder %s146, %s148
      %p155 = scmp.eq.s32.totalorder %s40, 1
      %p156 = por %p154, %p155
      %p157 = scmp.ne.s32.totalorder %s148, %s149
      %p158 = scmp.eq.s32.totalorder %s40, 0
      %p159 = por %p157, %p158
      %p160 = scmp.ne.s32.totalorder %s148, %s149
      %p161 = scmp.eq.s32.totalorder %s41, 1
      %p162 = por %p160, %p161
      %p164 = scmp.ne.s32.totalorder %s149, %s163
      %p165 = scmp.eq.s32.totalorder %s41, 0
      %p166 = por %p164, %p165
      %s168 = sadd.s32 %s167, 1
      %p171 = scmp.eq.s32.totalorder %s35, 1
      %p172 = scmp.ne.s32.totalorder %s167, %s169
      %p173 = scmp.eq.s32.totalorder %s35, 0
      %p174 = por %p172, %p173
      %p175 = scmp.ne.s32.totalorder %s167, %s169
      %p176 = scmp.eq.s32.totalorder %s40, 1
      %p177 = por %p175, %p176
      %p178 = scmp.ne.s32.totalorder %s169, %s170
      %p179 = scmp.eq.s32.totalorder %s40, 0
      %p180 = por %p178, %p179
      %p181 = scmp.ne.s32.totalorder %s169, %s170
      %p182 = scmp.eq.s32.totalorder %s41, 1
      %p183 = por %p181, %p182
      %p185 = scmp.ne.s32.totalorder %s170, %s184
      %p186 = scmp.eq.s32.totalorder %s41, 0
      %p187 = por %p185, %p186
      %s189 = sadd.s32 %s188, 1
      %p192 = scmp.eq.s32.totalorder %s35, 1
      %p193 = scmp.ne.s32.totalorder %s188, %s190
      %p194 = scmp.eq.s32.totalorder %s35, 0
      %p195 = por %p193, %p194
      %p196 = scmp.ne.s32.totalorder %s188, %s190
      %p197 = scmp.eq.s32.totalorder %s40, 1
      %p198 = por %p196, %p197
      %p199 = scmp.ne.s32.totalorder %s190, %s191
      %p200 = scmp.eq.s32.totalorder %s40, 0
      %p201 = por %p199, %p200
      %p202 = scmp.ne.s32.totalorder %s190, %s191
      %p203 = scmp.eq.s32.totalorder %s41, 1
      %p204 = por %p202, %p203
      %p206 = scmp.ne.s32.totalorder %s191, %s205
      %p207 = scmp.eq.s32.totalorder %s41, 0
      %p208 = por %p206, %p207
      %s210 = sadd.s32 %s209, 1
      %p213 = scmp.eq.s32.totalorder %s35, 1
      %p214 = scmp.ne.s32.totalorder %s209, %s211
      %p215 = scmp.eq.s32.totalorder %s35, 0
      %p216 = por %p214, %p215
      %p217 = scmp.ne.s32.totalorder %s209, %s211
      %p218 = scmp.eq.s32.totalorder %s40, 1
      %p219 = por %p217, %p218
      %p220 = scmp.ne.s32.totalorder %s211, %s212
      %p221 = scmp.eq.s32.totalorder %s40, 0
      %p222 = por %p220, %p221
      %p223 = scmp.ne.s32.totalorder %s211, %s212
      %p224 = scmp.eq.s32.totalorder %s41, 1
      %p225 = por %p223, %p224
      %p227 = scmp.ne.s32.totalorder %s212, %s226
      %p228 = scmp.eq.s32.totalorder %s41, 0
      %p229 = por %p227, %p228
      %s231 = sadd.s32 %s230, 1
      %p234 = scmp.eq.s32.totalorder %s35, 1
      %p235 = scmp.ne.s32.totalorder %s230, %s232
      %p236 = scmp.eq.s32.totalorder %s35, 0
      %p237 = por %p235, %p236
      %p238 = scmp.ne.s32.totalorder %s230, %s232
      %p239 = scmp.eq.s32.totalorder %s40, 1
      %p240 = por %p238, %p239
      %p241 = scmp.ne.s32.totalorder %s232, %s233
      %p242 = scmp.eq.s32.totalorder %s40, 0
      %p243 = por %p241, %p242
      %p244 = scmp.ne.s32.totalorder %s232, %s233
      %p245 = scmp.eq.s32.totalorder %s41, 1
      %p246 = por %p244, %p245
      %p248 = scmp.ne.s32.totalorder %s233, %s247
      %p249 = scmp.eq.s32.totalorder %s41, 0
      %p250 = por %p248, %p249
      %s252 = sadd.s32 %s251, 1
      %p255 = scmp.eq.s32.totalorder %s35, 1
      %p256 = scmp.ne.s32.totalorder %s251, %s253
      %p257 = scmp.eq.s32.totalorder %s35, 0
      %p258 = por %p256, %p257
      %p259 = scmp.ne.s32.totalorder %s251, %s253
      %p260 = scmp.eq.s32.totalorder %s40, 1
      %p261 = por %p259, %p260
      %p262 = scmp.ne.s32.totalorder %s253, %s254
      %p263 = scmp.eq.s32.totalorder %s40, 0
      %p264 = por %p262, %p263
      %p265 = scmp.ne.s32.totalorder %s253, %s254
      %p266 = scmp.eq.s32.totalorder %s41, 1
      %p267 = por %p265, %p266
      %p269 = scmp.ne.s32.totalorder %s254, %s268
      %p270 = scmp.eq.s32.totalorder %s41, 0
      %p271 = por %p269, %p270
      %s273 = sadd.s32 %s272, 1
      %p276 = scmp.eq.s32.totalorder %s35, 1
      %p277 = scmp.ne.s32.totalorder %s272, %s274
      %p278 = scmp.eq.s32.totalorder %s35, 0
      %p279 = por %p277, %p278
      %p280 = scmp.ne.s32.totalorder %s272, %s274
      %p281 = scmp.eq.s32.totalorder %s40, 1
      %p282 = por %p280, %p281
      %p283 = scmp.ne.s32.totalorder %s274, %s275
      %p284 = scmp.eq.s32.totalorder %s40, 0
      %p285 = por %p283, %p284
      %p286 = scmp.ne.s32.totalorder %s274, %s275
      %p287 = scmp.eq.s32.totalorder %s41, 1
      %p288 = por %p286, %p287
      %p290 = scmp.ne.s32.totalorder %s275, %s289
      %p291 = scmp.eq.s32.totalorder %s41, 0
      %p292 = por %p290, %p291
      %s293 = ssub.s32 %s42, %s54
      %s294 = ssub.s32 %s43, %s50
      %s295 = sor.u32 %s293, %s294
      %p296 = scmp.eq.s32.totalorder %s295, 0
      %s298 = sadd.s32 %s297, 1
      %s299 = scalar_select %p296, %s297, %s298
      %p302 = pneg %p296
      %p303 = scmp.eq.s32.totalorder %s35, 1
      %p304 = por %p302, %p303
      %p305 = scmp.ne.s32.totalorder %s297, %s300
      %p306 = scmp.eq.s32.totalorder %s35, 0
      %p307 = por %p305, %p306
      %p308 = scmp.ne.s32.totalorder %s297, %s300
      %p309 = scmp.eq.s32.totalorder %s40, 1
      %p310 = por %p308, %p309
      %p311 = scmp.ne.s32.totalorder %s300, %s301
      %p312 = scmp.eq.s32.totalorder %s40, 0
      %p313 = por %p311, %p312
      %p314 = scmp.ne.s32.totalorder %s300, %s301
      %p315 = scmp.eq.s32.totalorder %s41, 1
      %p316 = por %p314, %p315
      %p318 = scmp.ne.s32.totalorder %s301, %s317
      %p319 = scmp.eq.s32.totalorder %s41, 0
      %p320 = por %p318, %p319
      %s321 = ssub.s32 %s42, %s54
      %s322 = ssub.s32 %s43, %s50
      %s323 = sor.u32 %s321, %s322
      %p324 = scmp.eq.s32.totalorder %s323, 0
      %s326 = sadd.s32 %s325, 1
      %s327 = scalar_select %p324, %s325, %s326
      %p330 = pneg %p324
      %p331 = scmp.eq.s32.totalorder %s35, 1
      %p332 = por %p330, %p331
      %p333 = scmp.ne.s32.totalorder %s325, %s328
      %p334 = scmp.eq.s32.totalorder %s35, 0
      %p335 = por %p333, %p334
      %p336 = scmp.ne.s32.totalorder %s325, %s328
      %p337 = scmp.eq.s32.totalorder %s40, 1
      %p338 = por %p336, %p337
      %p339 = scmp.ne.s32.totalorder %s328, %s329
      %p340 = scmp.eq.s32.totalorder %s40, 0
      %p341 = por %p339, %p340
      %p342 = scmp.ne.s32.totalorder %s328, %s329
      %p343 = scmp.eq.s32.totalorder %s41, 1
      %p344 = por %p342, %p343
      %p346 = scmp.ne.s32.totalorder %s329, %s345
      %p347 = scmp.eq.s32.totalorder %s41, 0
      %p348 = por %p346, %p347
      %s349 = ssub.s32 %s42, %s54
      %s350 = ssub.s32 %s43, %s50
      %s351 = sor.u32 %s349, %s350
      %p352 = scmp.eq.s32.totalorder %s351, 0
      %s354 = sadd.s32 %s353, 1
      %s355 = scalar_select %p352, %s353, %s354
      %p358 = pneg %p352
      %p359 = scmp.eq.s32.totalorder %s35, 1
      %p360 = por %p358, %p359
      %p361 = scmp.ne.s32.totalorder %s353, %s356
      %p362 = scmp.eq.s32.totalorder %s35, 0
      %p363 = por %p361, %p362
      %p364 = scmp.ne.s32.totalorder %s353, %s356
      %p365 = scmp.eq.s32.totalorder %s40, 1
      %p366 = por %p364, %p365
      %p367 = scmp.ne.s32.totalorder %s356, %s357
      %p368 = scmp.eq.s32.totalorder %s40, 0
      %p369 = por %p367, %p368
      %p370 = scmp.ne.s32.totalorder %s356, %s357
      %p371 = scmp.eq.s32.totalorder %s41, 1
      %p372 = por %p370, %p371
      %p374 = scmp.ne.s32.totalorder %s357, %s373
      %p375 = scmp.eq.s32.totalorder %s41, 0
      %p376 = por %p374, %p375
      %s377 = ssub.s32 %s42, %s54
      %s378 = ssub.s32 %s43, %s50
      %s379 = sor.u32 %s377, %s378
      %p380 = scmp.eq.s32.totalorder %s379, 0
      %s382 = sadd.s32 %s381, 1
      %s383 = scalar_select %p380, %s381, %s382
      %p386 = pneg %p380
      %p387 = scmp.eq.s32.totalorder %s35, 1
      %p388 = por %p386, %p387
      %p389 = scmp.ne.s32.totalorder %s381, %s384
      %p390 = scmp.eq.s32.totalorder %s35, 0
      %p391 = por %p389, %p390
      %p392 = scmp.ne.s32.totalorder %s381, %s384
      %p393 = scmp.eq.s32.totalorder %s40, 1
      %p394 = por %p392, %p393
      %p395 = scmp.ne.s32.totalorder %s384, %s385
      %p396 = scmp.eq.s32.totalorder %s40, 0
      %p397 = por %p395, %p396
      %p398 = scmp.ne.s32.totalorder %s384, %s385
      %p399 = scmp.eq.s32.totalorder %s41, 1
      %p400 = por %p398, %p399
      %p402 = scmp.ne.s32.totalorder %s385, %s401
      %p403 = scmp.eq.s32.totalorder %s41, 0
      %p404 = por %p402, %p403
      %p405 = scmp.le.s32.totalorder 1, %s35
      %p406 = scmp.lt.s32.totalorder %s35, 3
      %p407 = pnand %p405, %p406
      %p408 = pneg %p407
      // Predicated region
      $region9: #{tpu_custom_call.1} parent=5 // pred_check
        _
      $region10: #{tpu_custom_call.1} parent=5 // pred_check_branch
        %410 = sbr.rel (%p407) target = $region12
      $region11: #{tpu_custom_call.1} parent=5 // pred_region
        %s411 = ssub.s32 %s35, 1
        // Predicated region
        $region13: #{tpu_custom_call.1} parent=11 // pred_check
          %p412 = pneg %p96
        $region14: #{tpu_custom_call.1} parent=11 // pred_check_branch
          %414 = sbr.rel (%p412) target = $region16
        $region15: #{tpu_custom_call.1} parent=11 // pred_region
          _
        $region16: #{tpu_custom_call.1} parent=11 // pred_fallthru
          _
        // Predicated region
        $region17: #{tpu_custom_call.1} parent=11 // pred_check
          %p415 = pneg %p117
        $region18: #{tpu_custom_call.1} parent=11 // pred_check_branch
          %417 = sbr.rel (%p415) target = $region20
        $region19: #{tpu_custom_call.1} parent=11 // pred_region
          _
        $region20: #{tpu_custom_call.1} parent=11 // pred_fallthru
          _
        // Predicated region
        $region21: #{tpu_custom_call.1} parent=11 // pred_check
          %p418 = pneg %p138
        $region22: #{tpu_custom_call.1} parent=11 // pred_check_branch
          %420 = sbr.rel (%p418) target = $region24
        $region23: #{tpu_custom_call.1} parent=11 // pred_region
          %s422 = ssub.s32 256, 256
          %423 = vsyncadd [#allocation6], %s422
          %s424 = sshll.u32 [#allocation5], 4
          %s425 = int_to_ptr.vmem [resolvable:$true] %s424
          %430 = dma.hbm_to_vmem [thread:$0]  %s3, 256, %s425, [#allocation6], 64, 64, 4
        $region24: #{tpu_custom_call.1} parent=11 // pred_fallthru
          _
        // Predicated region
        $region25: #{tpu_custom_call.1} parent=11 // pred_check
          %p431 = pneg %p159
        $region26: #{tpu_custom_call.1} parent=11 // pred_check_branch
          %433 = sbr.rel (%p431) target = $region28
        $region27: #{tpu_custom_call.1} parent=11 // pred_region
          %s435 = ssub.s32 16, 16
          %436 = vsyncadd [#allocation6], %s435
          %s438 = sshll.u32 [#allocation7], 4
          %s439 = int_to_ptr.vmem [resolvable:$true] %s438
          %441 = dma.hbm_to_vmem [thread:$0]  %s4, 16, %s439, [#allocation6]
        $region28: #{tpu_custom_call.1} parent=11 // pred_fallthru
          _
        // Predicated region
        $region29: #{tpu_custom_call.1} parent=11 // pred_check
          %p442 = pneg %p180
        $region30: #{tpu_custom_call.1} parent=11 // pred_check_branch
          %444 = sbr.rel (%p442) target = $region32
        $region31: #{tpu_custom_call.1} parent=11 // pred_region
          _
        $region32: #{tpu_custom_call.1} parent=11 // pred_fallthru
          _
        // Predicated region
        $region33: #{tpu_custom_call.1} parent=11 // pred_check
          %p445 = pneg %p201
        $region34: #{tpu_custom_call.1} parent=11 // pred_check_branch
          %447 = sbr.rel (%p445) target = $region36
        $region35: #{tpu_custom_call.1} parent=11 // pred_region
          _
        $region36: #{tpu_custom_call.1} parent=11 // pred_fallthru
          _
        // Predicated region
        $region37: #{tpu_custom_call.1} parent=11 // pred_check
          %p448 = pneg %p222
        $region38: #{tpu_custom_call.1} parent=11 // pred_check_branch
          %450 = sbr.rel (%p448) target = $region40
        $region39: #{tpu_custom_call.1} parent=11 // pred_region
          %s452 = ssub.s32 256, 256
          %453 = vsyncadd [#allocation9], %s452
          %s454 = sshll.u32 [#allocation8], 4
          %s455 = int_to_ptr.vmem [resolvable:$true] %s454
          %460 = dma.hbm_to_vmem [thread:$0]  %s7, 256, %s455, [#allocation9], 64, 64, 4
        $region40: #{tpu_custom_call.1} parent=11 // pred_fallthru
          _
        // Predicated region
        $region41: #{tpu_custom_call.1} parent=11 // pred_check
          %p461 = pneg %p243
        $region42: #{tpu_custom_call.1} parent=11 // pred_check_branch
          %463 = sbr.rel (%p461) target = $region44
        $region43: #{tpu_custom_call.1} parent=11 // pred_region
          _
        $region44: #{tpu_custom_call.1} parent=11 // pred_fallthru
          _
        // Predicated region
        $region45: #{tpu_custom_call.1} parent=11 // pred_check
          %p464 = pneg %p264
        $region46: #{tpu_custom_call.1} parent=11 // pred_check_branch
          %466 = sbr.rel (%p464) target = $region48
        $region47: #{tpu_custom_call.1} parent=11 // pred_region
          _
        $region48: #{tpu_custom_call.1} parent=11 // pred_fallthru
          _
        // Predicated region
        $region49: #{tpu_custom_call.1} parent=11 // pred_check
          %p467 = pneg %p285
        $region50: #{tpu_custom_call.1} parent=11 // pred_check_branch
          %469 = sbr.rel (%p467) target = $region52
        $region51: #{tpu_custom_call.1} parent=11 // pred_region
          _
        $region52: #{tpu_custom_call.1} parent=11 // pred_fallthru
          _
      $region12: #{tpu_custom_call.1} parent=5 // pred_fallthru
        _
      %p470 = scmp.lt.s32.totalorder %s35, 2
      // Predicated region
      $region53: #{tpu_custom_call.1} parent=5 // pred_check
        %p471 = pneg %p470
      $region54: #{tpu_custom_call.1} parent=5 // pred_check_branch
        %473 = sbr.rel (%p471) target = $region56
      $region55: #{tpu_custom_call.1} parent=5 // pred_region
        // Predicated region
        $region57: #{tpu_custom_call.1} parent=55 // pred_check
          %p474 = pneg %p69
        $region58: #{tpu_custom_call.1} parent=55 // pred_check_branch
          %476 = sbr.rel (%p474) target = $region60
        $region59: #{tpu_custom_call.1} parent=55 // pred_region
          %s477 = sand.u32 %s59, 1
          %s478 = scalar_lea.sflag [#allocation3], %s477
          %s479 = sand.u32 %s59, 1
          %s480 = smul.addr %s479, 8
          %s481 = scalar_lea.vmem [#allocation2], %s480
          %s483 = ssub.s32 128, 128
          %484 = vsyncadd %s478, %s483
          %s485 = sadd.s32 %s43, %s42
          %s486 = smul.addr %s485, 128
          %s487 = scalar_lea.hbm %s0, %s486
          %s489 = sshll.u32 %s481, 4
          %s490 = int_to_ptr.vmem [resolvable:$true] %s489
          %492 = dma.hbm_to_vmem [thread:$0]  %s487, 128, %s490, %s478
        $region60: #{tpu_custom_call.1} parent=55 // pred_fallthru
          _
      $region56: #{tpu_custom_call.1} parent=5 // pred_fallthru
        _
      %p493 = scmp.le.s32.totalorder 1, %s35
      %p494 = scmp.lt.s32.totalorder %s35, 3
      %p495 = pnand %p493, %p494
      %p496 = pneg %p495
      // Predicated region
      $region61: #{tpu_custom_call.1} parent=5 // pred_check
        _
      $region62: #{tpu_custom_call.1} parent=5 // pred_check_branch
        %498 = sbr.rel (%p495) target = $region64
      $region63: #{tpu_custom_call.1} parent=5 // pred_region
        %s499 = ssub.s32 %s35, 1
        %s500 = sand.u32 %s62, 1
        %s501 = scalar_lea.sflag [#allocation3], %s500
        %s502 = sand.u32 %s62, 1
        %s503 = smul.addr %s502, 8
        %s504 = scalar_lea.vmem [#allocation2], %s503
        // Predicated region
        $region65: #{tpu_custom_call.1} parent=63 // pred_check
          %p505 = pneg %p75
        $region66: #{tpu_custom_call.1} parent=63 // pred_check_branch
          %507 = sbr.rel (%p505) target = $region68
        $region67: #{tpu_custom_call.1} parent=63 // pred_region
          %508 = dma.done %s501, 128
        $region68: #{tpu_custom_call.1} parent=63 // pred_fallthru
          _
        // Predicated region
        $region69: #{tpu_custom_call.1} parent=63 // pred_check
          %p509 = pneg %p138
        $region70: #{tpu_custom_call.1} parent=63 // pred_check_branch
          %511 = sbr.rel (%p509) target = $region72
        $region71: #{tpu_custom_call.1} parent=63 // pred_region
          %512 = dma.done [#allocation6], 256
        $region72: #{tpu_custom_call.1} parent=63 // pred_fallthru
          _
        // Predicated region
        $region73: #{tpu_custom_call.1} parent=63 // pred_check
          %p513 = pneg %p159
        $region74: #{tpu_custom_call.1} parent=63 // pred_check_branch
          %515 = sbr.rel (%p513) target = $region76
        $region75: #{tpu_custom_call.1} parent=63 // pred_region
          %516 = dma.done [#allocation6], 16
        $region76: #{tpu_custom_call.1} parent=63 // pred_fallthru
          _
        // Predicated region
        $region77: #{tpu_custom_call.1} parent=63 // pred_check
          %p517 = pneg %p222
        $region78: #{tpu_custom_call.1} parent=63 // pred_check_branch
          %519 = sbr.rel (%p517) target = $region80
        $region79: #{tpu_custom_call.1} parent=63 // pred_region
          %520 = dma.done [#allocation9], 256
        $region80: #{tpu_custom_call.1} parent=63 // pred_fallthru
          _
        %s521 = sand.u32 %s62, 1
        %s522 = scalar_lea.sflag [#allocation3], %s521
        %s523 = sand.u32 %s62, 1
        %s524 = smul.addr %s523, 8
        %s525 = scalar_lea.vmem [#allocation2], %s524
        %p526 = pneg %p75
        %p527 = pneg %p72
        %p528 = pneg %p96
        %p529 = pneg %p93
        %p530 = pneg %p117
        %p531 = pneg %p114
        %p532 = pneg %p138
        %p533 = pneg %p135
        %p534 = pneg %p159
        %p535 = pneg %p156
        %p536 = pneg %p180
        %p537 = pneg %p177
        %p538 = pneg %p201
        %p539 = pneg %p198
        %p540 = pneg %p222
        %p541 = pneg %p219
        %p542 = pneg %p243
        %p543 = pneg %p240
        %p544 = pneg %p264
        %p545 = pneg %p261
        %p546 = pneg %p285
        %p547 = pneg %p282
        %p548 = pneg %p313
        %p549 = pneg %p310
        %s550 = sand.u32 %s300, 1
        %s551 = scalar_lea.sflag [#allocation4], %s550
        %s552 = sand.u32 %s300, 1
        %s553 = smul.addr %s552, 4
        %s554 = scalar_lea.vmem [#allocation10], %s553
        %p555 = pneg %p341
        %p556 = pneg %p338
        %s557 = sand.u32 %s40, 1
        %s558 = scalar_lea.sflag [#allocation12], %s557
        %s559 = sand.u32 %s328, 1
        %s560 = smul.addr %s559, 4
        %s561 = scalar_lea.vmem [#allocation11], %s560
        %p562 = pneg %p369
        %p563 = pneg %p366
        %s564 = sand.u32 %s40, 1
        %s565 = scalar_lea.sflag [#allocation12], %s564
        %s566 = sand.u32 %s356, 1
        %s567 = smul.addr %s566, 4
        %s568 = scalar_lea.vmem [#allocation13], %s567
        %p569 = pneg %p397
        %p570 = pneg %p394
        %s571 = sand.u32 %s384, 1
        %s572 = scalar_lea.sflag [#allocation15], %s571
        %s573 = sand.u32 %s384, 1
        %s574 = smul.addr %s573, 4
        %s575 = scalar_lea.vmem [#allocation14], %s574
        %v577 = vld [vmem:[%s504] sm:$0xff]
        %vm578 = vcmask 261120
        %v579 = vsel %vm578, %v577, 0.0
        %580 = vadd.xlane.f32.xlu0 %v579
        %v581 = vpop.xlane.xlu0 %580
        %v582 = vrcp.pop 32.0
        %v583 = vmul.f32 %v581, %v582
        %v584 = vsub.f32 %v577, %v583
        %v585 = vmul.f32 %v584, %v584
        %v586 = vsel %vm578, %v585, 0.0
        %587 = vadd.xlane.f32.xlu0 %v586
        %v588 = vpop.xlane.xlu0 %587
        %v589 = vmul.f32 %v588, %v582
        %v590 = vadd.f32 %v589, 1e-05
        %v591 = vrsqrt.pop %v590
        %v592 = vmul.f32 %v584, %v591
        %v593 = vld [vmem:[%s1] sm:$0x1]
        %v595 = vlaneseq
        %v596 = vshrl.u32 %v595, 7
        %v597 = vsub.s32 0, %v596
        %v598 = vrot.slane %v593, %v597
        %v600 = vmul.f32 %v592, %v598
        %v601 = vld [vmem:[%s2] sm:$0x1]
        %v603 = vlaneseq
        %v604 = vshrl.u32 %v603, 7
        %v605 = vsub.s32 0, %v604
        %v606 = vrot.slane %v601, %v605
        %v608 = vadd.f32 %v600, %v606
        %v609 = vpack.c.bf16 %v608, %v608
        %v610 = vld [vmem:[#allocation5] sm:$0xf]
        %v611 = vld [vmem:[#allocation5 + $0x4] sm:$0xf]
        %v612 = vld [vmem:[#allocation5 + $0x8] sm:$0xf]
        %v613 = vld [vmem:[#allocation5 + $0xc] sm:$0xf]
        %v614 = vld [vmem:[#allocation7] sm:$0x1]
        %v616 = vlaneseq
        %v617 = vshrl.u32 %v616, 7
        %v618 = vsub.s32 0, %v617
        %v619 = vrot.slane %v614, %v618
        %v625 = vunpack.c.l.b16 %v610
        %v626 = vunpack.c.l.b16 %v611
        %v627 = vunpack.c.l.b16 %v612
        %v628 = vunpack.c.l.b16 %v613
        %v629 = vpack.c.b16 %v626, %v625
        %v630 = vpack.c.b16 %v628, %v627
        %v634 = vsel %vm578, %v609, 0
        %636 = vmatprep.subr.bf16.mxu0 0
        %637 = vmatpush1.bf16.msra.mxu0 %v629
        %638 = vmatprep.subr.bf16.mxu0 0
        %639 = vmatpush1.bf16.msra.mxu0 %v630
        %640 = vmatprep.subr.bf16.mxu0 0
        %641 = vmatpush1.bf16.msra.mxu0 0
        %642 = vmatprep.subr.bf16.mxu0 0
        %643 = vmatpush1.bf16.msra.mxu0 0
        %644 = vmatprep.subr.bf16.mxu0 0
        %645 = vmatpush1.bf16.msra.mxu0 0
        %646 = vmatprep.subr.bf16.mxu0 0
        %647 = vmatpush1.bf16.msra.mxu0 0
        %648 = vmatprep.subr.bf16.mxu0 0
        %649 = vmatpush1.bf16.msra.mxu0 0
        %650 = vmatprep.subr.bf16.mxu0 0
        %651 = vmatpush1.bf16.msra.mxu0 0
        %652 = vmatprep.subr.bf16.mxu0 0
        %653 = vmatpush1.bf16.msra.mxu0 0
        %654 = vmatprep.subr.bf16.mxu0 0
        %655 = vmatpush1.bf16.msra.mxu0 0
        %656 = vmatprep.subr.bf16.mxu0 0
        %657 = vmatpush1.bf16.msra.mxu0 0
        %658 = vmatprep.subr.bf16.mxu0 0
        %659 = vmatpush1.bf16.msra.mxu0 0
        %660 = vmatprep.subr.bf16.mxu0 0
        %661 = vmatpush1.bf16.msra.mxu0 0
        %662 = vmatprep.subr.bf16.mxu0 0
        %663 = vmatpush1.bf16.msra.mxu0 0
        %664 = vmatprep.subr.bf16.mxu0 0
        %665 = vmatpush1.bf16.msra.mxu0 0
        %666 = vmatprep.subr.bf16.mxu0 0
        %667 = vmatpush1.bf16.msra.mxu0 0
        %668 = vmatprep.mubr.bf16.mxu0 0
        %669 = vmatmul.mubr.bf16.gmra.mrb[0].mxu0 %v634
        %v670 = vpop.f32.mrb[0].mxu0
        %v671 = vadd.f32 %v619, %v670
        %v672 = vpop.f32.mrb[0].mxu0
        %v673 = vpop.f32.mrb[0].mxu0
        %v674 = vpop.f32.mrb[0].mxu0
        %675 = vdwg.mxu0
        %v676 = vld [vmem:[%s5] sm:$0xf]
        %v677 = vld [vmem:[%s5 + $0x4] sm:$0xf]
        %v678 = vld [vmem:[%s5 + $0x8] sm:$0xf]
        %v679 = vld [vmem:[%s5 + $0xc] sm:$0xf]
        %v680 = vld [vmem:[%s6] sm:$0x1]
        %v682 = vlaneseq
        %v683 = vshrl.u32 %v682, 7
        %v684 = vsub.s32 0, %v683
        %v685 = vrot.slane %v680, %v684
        %v691 = vunpack.c.l.b16 %v676
        %v692 = vunpack.c.l.b16 %v677
        %v693 = vunpack.c.l.b16 %v678
        %v694 = vunpack.c.l.b16 %v679
        %v695 = vpack.c.b16 %v692, %v691
        %v696 = vpack.c.b16 %v694, %v693
        %699 = vmatprep.subr.bf16.mxu0 0
        %700 = vmatpush1.bf16.msra.mxu0 %v695
        %701 = vmatprep.subr.bf16.mxu0 0
        %702 = vmatpush1.bf16.msra.mxu0 %v696
        %703 = vmatprep.subr.bf16.mxu0 0
        %704 = vmatpush1.bf16.msra.mxu0 0
        %705 = vmatprep.subr.bf16.mxu0 0
        %706 = vmatpush1.bf16.msra.mxu0 0
        %707 = vmatprep.subr.bf16.mxu0 0
        %708 = vmatpush1.bf16.msra.mxu0 0
        %709 = vmatprep.subr.bf16.mxu0 0
        %710 = vmatpush1.bf16.msra.mxu0 0
        %711 = vmatprep.subr.bf16.mxu0 0
        %712 = vmatpush1.bf16.msra.mxu0 0
        %713 = vmatprep.subr.bf16.mxu0 0
        %714 = vmatpush1.bf16.msra.mxu0 0
        %715 = vmatprep.subr.bf16.mxu0 0
        %716 = vmatpush1.bf16.msra.mxu0 0
        %717 = vmatprep.subr.bf16.mxu0 0
        %718 = vmatpush1.bf16.msra.mxu0 0
        %719 = vmatprep.subr.bf16.mxu0 0
        %720 = vmatpush1.bf16.msra.mxu0 0
        %721 = vmatprep.subr.bf16.mxu0 0
        %722 = vmatpush1.bf16.msra.mxu0 0
        %723 = vmatprep.subr.bf16.mxu0 0
        %724 = vmatpush1.bf16.msra.mxu0 0
        %725 = vmatprep.subr.bf16.mxu0 0
        %726 = vmatpush1.bf16.msra.mxu0 0
        %727 = vmatprep.subr.bf16.mxu0 0
        %728 = vmatpush1.bf16.msra.mxu0 0
        %729 = vmatprep.subr.bf16.mxu0 0
        %730 = vmatpush1.bf16.msra.mxu0 0
        %731 = vmatprep.mubr.bf16.mxu0 0
        %732 = vmatmul.mubr.bf16.gmra.mrb[0].mxu0 %v634
        %v733 = vpop.f32.mrb[0].mxu0
        %v734 = vadd.f32 %v685, %v733
        %v735 = vpop.f32.mrb[0].mxu0
        %v736 = vpop.f32.mrb[0].mxu0
        %v737 = vpop.f32.mrb[0].mxu0
        %738 = vdwg.mxu0
        %v739 = vld [vmem:[#allocation8] sm:$0xf]
        %v740 = vld [vmem:[#allocation8 + $0x4] sm:$0xf]
        %v741 = vld [vmem:[#allocation8 + $0x8] sm:$0xf]
        %v742 = vld [vmem:[#allocation8 + $0xc] sm:$0xf]
        %v743 = vld [vmem:[%s8] sm:$0x1]
        %v745 = vlaneseq
        %v746 = vshrl.u32 %v745, 7
        %v747 = vsub.s32 0, %v746
        %v748 = vrot.slane %v743, %v747
        %v754 = vunpack.c.l.b16 %v739
        %v755 = vunpack.c.l.b16 %v740
        %v756 = vunpack.c.l.b16 %v741
        %v757 = vunpack.c.l.b16 %v742
        %v758 = vpack.c.b16 %v755, %v754
        %v759 = vpack.c.b16 %v757, %v756
        %762 = vmatprep.subr.bf16.mxu0 0
        %763 = vmatpush1.bf16.msra.mxu0 %v758
        %764 = vmatprep.subr.bf16.mxu0 0
        %765 = vmatpush1.bf16.msra.mxu0 %v759
        %766 = vmatprep.subr.bf16.mxu0 0
        %767 = vmatpush1.bf16.msra.mxu0 0
        %768 = vmatprep.subr.bf16.mxu0 0
        %769 = vmatpush1.bf16.msra.mxu0 0
        %770 = vmatprep.subr.bf16.mxu0 0
        %771 = vmatpush1.bf16.msra.mxu0 0
        %772 = vmatprep.subr.bf16.mxu0 0
        %773 = vmatpush1.bf16.msra.mxu0 0
        %774 = vmatprep.subr.bf16.mxu0 0
        %775 = vmatpush1.bf16.msra.mxu0 0
        %776 = vmatprep.subr.bf16.mxu0 0
        %777 = vmatpush1.bf16.msra.mxu0 0
        %778 = vmatprep.subr.bf16.mxu0 0
        %779 = vmatpush1.bf16.msra.mxu0 0
        %780 = vmatprep.subr.bf16.mxu0 0
        %781 = vmatpush1.bf16.msra.mxu0 0
        %782 = vmatprep.subr.bf16.mxu0 0
        %783 = vmatpush1.bf16.msra.mxu0 0
        %784 = vmatprep.subr.bf16.mxu0 0
        %785 = vmatpush1.bf16.msra.mxu0 0
        %786 = vmatprep.subr.bf16.mxu0 0
        %787 = vmatpush1.bf16.msra.mxu0 0
        %788 = vmatprep.subr.bf16.mxu0 0
        %789 = vmatpush1.bf16.msra.mxu0 0
        %790 = vmatprep.subr.bf16.mxu0 0
        %791 = vmatpush1.bf16.msra.mxu0 0
        %792 = vmatprep.subr.bf16.mxu0 0
        %793 = vmatpush1.bf16.msra.mxu0 0
        %794 = vmatprep.mubr.bf16.mxu0 0
        %795 = vmatmul.mubr.bf16.gmra.mrb[0].mxu0 %v634
        %v796 = vpop.f32.mrb[0].mxu0
        %v797 = vadd.f32 %v748, %v796
        %v798 = vpop.f32.mrb[0].mxu0
        %v799 = vpop.f32.mrb[0].mxu0
        %v800 = vpop.f32.mrb[0].mxu0
        %801 = vdwg.mxu0
        %v802 = vld [vmem:[%s9] sm:$0x1]
        %v804 = vlaneseq
        %v805 = vshrl.u32 %v804, 7
        %v806 = vsub.s32 0, %v805
        %v807 = vrot.slane %v802, %v806
        %v809 = vadd.f32 %v671, %v807
        %v810 = vpack.c.bf16 %v809, %v809
        %vm811 = vcmask 257024
        %812 = vst.msk [vmem:[%s554] sm:$0xf] %vm811, %v810
        %v813 = vld [vmem:[%s10] sm:$0x1]
        %v815 = vlaneseq
        %v816 = vshrl.u32 %v815, 7
        %v817 = vsub.s32 0, %v816
        %v818 = vrot.slane %v813, %v817
        %v820 = vadd.f32 %v671, %v818
        %v821 = vpack.c.bf16 %v820, %v820
        %822 = vst.msk [vmem:[%s561] sm:$0xf] %vm811, %v821
        %v823 = vpack.c.bf16 %v734, %v734
        %824 = vst.msk [vmem:[%s568] sm:$0xf] %vm811, %v823
        %v825 = vpack.c.bf16 %v797, %v797
        %826 = vst.msk [vmem:[%s575] sm:$0xf] %vm811, %v825
        %s827 = sand.u32 %s300, 1
        %s828 = scalar_lea.sflag [#allocation4], %s827
        %s829 = sand.u32 %s300, 1
        %s830 = smul.addr %s829, 4
        %s831 = scalar_lea.vmem [#allocation10], %s830
        %s832 = sand.u32 %s40, 1
        %s833 = scalar_lea.sflag [#allocation12], %s832
        %s834 = sand.u32 %s328, 1
        %s835 = smul.addr %s834, 4
        %s836 = scalar_lea.vmem [#allocation11], %s835
        %s837 = sand.u32 %s40, 1
        %s838 = scalar_lea.sflag [#allocation12], %s837
        %s839 = sand.u32 %s356, 1
        %s840 = smul.addr %s839, 4
        %s841 = scalar_lea.vmem [#allocation13], %s840
        %s842 = sand.u32 %s384, 1
        %s843 = scalar_lea.sflag [#allocation15], %s842
        %s844 = sand.u32 %s384, 1
        %s845 = smul.addr %s844, 4
        %s846 = scalar_lea.vmem [#allocation14], %s845
        // Predicated region
        $region81: #{tpu_custom_call.1} parent=63 // pred_check
          %p847 = pneg %p310
        $region82: #{tpu_custom_call.1} parent=63 // pred_check_branch
          %849 = sbr.rel (%p847) target = $region84
        $region83: #{tpu_custom_call.1} parent=63 // pred_region
          %s851 = ssub.s32 64, 64
          %852 = vsyncadd %s828, %s851
          %s853 = sadd.s32 %s45, %s44
          %s854 = smul.addr %s853, 64
          %s855 = scalar_lea.hbm %s11, %s854
          %s857 = sshll.u32 %s831, 4
          %s858 = int_to_ptr.vmem [resolvable:$true] %s857
          %860 = dma.vmem_to_hbm [thread:$0]  %s858, 64, %s855, %s828
        $region84: #{tpu_custom_call.1} parent=63 // pred_fallthru
          _
        // Predicated region
        $region85: #{tpu_custom_call.1} parent=63 // pred_check
          %p861 = pneg %p338
        $region86: #{tpu_custom_call.1} parent=63 // pred_check_branch
          %863 = sbr.rel (%p861) target = $region88
        $region87: #{tpu_custom_call.1} parent=63 // pred_region
          %s865 = ssub.s32 64, 64
          %866 = vsyncadd %s833, %s865
          %s867 = sadd.s32 %s45, %s44
          %s868 = smul.addr %s867, 64
          %s869 = scalar_lea.hbm %s12, %s868
          %s871 = sshll.u32 %s836, 4
          %s872 = int_to_ptr.vmem [resolvable:$true] %s871
          %874 = dma.vmem_to_hbm [thread:$0]  %s872, 64, %s869, %s833
        $region88: #{tpu_custom_call.1} parent=63 // pred_fallthru
          _
        // Predicated region
        $region89: #{tpu_custom_call.1} parent=63 // pred_check
          %p875 = pneg %p366
        $region90: #{tpu_custom_call.1} parent=63 // pred_check_branch
          %877 = sbr.rel (%p875) target = $region92
        $region91: #{tpu_custom_call.1} parent=63 // pred_region
          %s879 = ssub.s32 64, 64
          %880 = vsyncadd %s838, %s879
          %s881 = sadd.s32 %s45, %s44
          %s882 = smul.addr %s881, 64
          %s883 = scalar_lea.hbm %s13, %s882
          %s885 = sshll.u32 %s841, 4
          %s886 = int_to_ptr.vmem [resolvable:$true] %s885
          %888 = dma.vmem_to_hbm [thread:$0]  %s886, 64, %s883, %s838
        $region92: #{tpu_custom_call.1} parent=63 // pred_fallthru
          _
        // Predicated region
        $region93: #{tpu_custom_call.1} parent=63 // pred_check
          %p889 = pneg %p394
        $region94: #{tpu_custom_call.1} parent=63 // pred_check_branch
          %891 = sbr.rel (%p889) target = $region96
        $region95: #{tpu_custom_call.1} parent=63 // pred_region
          %s893 = ssub.s32 64, 64
          %894 = vsyncadd %s843, %s893
          %s895 = sadd.s32 %s45, %s44
          %s896 = smul.addr %s895, 64
          %s897 = scalar_lea.hbm %s14, %s896
          %s899 = sshll.u32 %s846, 4
          %s900 = int_to_ptr.vmem [resolvable:$true] %s899
          %902 = dma.vmem_to_hbm [thread:$0]  %s900, 64, %s897, %s843
        $region96: #{tpu_custom_call.1} parent=63 // pred_fallthru
          _
      $region64: #{tpu_custom_call.1} parent=5 // pred_fallthru
        _
      %p903 = scmp.le.s32.totalorder 2, %s35
      // Predicated region
      $region97: #{tpu_custom_call.1} parent=5 // pred_check
        %p904 = pneg %p903
      $region98: #{tpu_custom_call.1} parent=5 // pred_check_branch
        %906 = sbr.rel (%p904) target = $region100
      $region99: #{tpu_custom_call.1} parent=5 // pred_region
        %s907 = ssub.s32 %s35, 2
        // Predicated region
        $region101: #{tpu_custom_call.1} parent=99 // pred_check
          %p908 = pneg %p316
        $region102: #{tpu_custom_call.1} parent=99 // pred_check_branch
          %910 = sbr.rel (%p908) target = $region104
        $region103: #{tpu_custom_call.1} parent=99 // pred_region
          %s911 = sand.u32 %s301, 1
          %s912 = scalar_lea.sflag [#allocation4], %s911
          %s913 = sand.u32 %s301, 1
          %s914 = smul.addr %s913, 4
          %s915 = scalar_lea.vmem [#allocation10], %s914
          %916 = dma.done %s912, 64
        $region104: #{tpu_custom_call.1} parent=99 // pred_fallthru
          _
        // Predicated region
        $region105: #{tpu_custom_call.1} parent=99 // pred_check
          %p917 = pneg %p344
        $region106: #{tpu_custom_call.1} parent=99 // pred_check_branch
          %919 = sbr.rel (%p917) target = $region108
        $region107: #{tpu_custom_call.1} parent=99 // pred_region
          %s920 = sand.u32 %s41, 1
          %s921 = scalar_lea.sflag [#allocation12], %s920
          %s922 = sand.u32 %s329, 1
          %s923 = smul.addr %s922, 4
          %s924 = scalar_lea.vmem [#allocation11], %s923
          %925 = dma.done %s921, 64
        $region108: #{tpu_custom_call.1} parent=99 // pred_fallthru
          _
        // Predicated region
        $region109: #{tpu_custom_call.1} parent=99 // pred_check
          %p926 = pneg %p372
        $region110: #{tpu_custom_call.1} parent=99 // pred_check_branch
          %928 = sbr.rel (%p926) target = $region112
        $region111: #{tpu_custom_call.1} parent=99 // pred_region
          %s929 = sand.u32 %s41, 1
          %s930 = scalar_lea.sflag [#allocation12], %s929
          %s931 = sand.u32 %s357, 1
          %s932 = smul.addr %s931, 4
          %s933 = scalar_lea.vmem [#allocation13], %s932
          %934 = dma.done %s930, 64
        $region112: #{tpu_custom_call.1} parent=99 // pred_fallthru
          _
        // Predicated region
        $region113: #{tpu_custom_call.1} parent=99 // pred_check
          %p935 = pneg %p400
        $region114: #{tpu_custom_call.1} parent=99 // pred_check_branch
          %937 = sbr.rel (%p935) target = $region116
        $region115: #{tpu_custom_call.1} parent=99 // pred_region
          %s938 = sand.u32 %s385, 1
          %s939 = scalar_lea.sflag [#allocation15], %s938
          %s940 = sand.u32 %s385, 1
          %s941 = smul.addr %s940, 4
          %s942 = scalar_lea.vmem [#allocation14], %s941
          %943 = dma.done %s939, 64
        $region116: #{tpu_custom_call.1} parent=99 // pred_fallthru
          _
      $region100: #{tpu_custom_call.1} parent=5 // pred_fallthru
        _
    $region6: #{tpu_custom_call.1} parent=1 // loop_footer
      %s39 = sadd.s32 1, %s35
    $region7: #{tpu_custom_call.1} parent=1 // loop_footer_branch
      %34 = sbr.rel target = $region3
    $region8: #{tpu_custom_call.1} parent=1 // loop_exit
      _
    %944 = vsyncpa [#allocation3], 1
    %s945 = scalar_lea.sflag [#allocation3], 1
    %946 = vsyncpa %s945, 1
    %947 = vsyncpa [#allocation6], 1
    %948 = vsyncpa [#allocation9], 1
    %949 = vsyncpa [#allocation4], 1
    %s950 = scalar_lea.sflag [#allocation4], 1
    %951 = vsyncpa %s950, 1
    %952 = vsyncpa [#allocation12], 1
    %s953 = scalar_lea.sflag [#allocation12], 1
    %954 = vsyncpa %s953, 1
    %955 = vsyncpa [#allocation15], 1
    %s956 = scalar_lea.sflag [#allocation15], 1
    %957 = vsyncpa %s956, 1

// kernel: tpu_custom_call.1
$region0: #{tpu_custom_call.1}
  #allocation0 [shape = 'u32[]', space=smem, size = 0x4, offset = 0x4, fixed_abs, tag = 'smem constant byte address 0x4 - core index']
  #allocation1 [shape = 'u32[144,128]{1,0:T(1,128)}', space=vmem, size = 0x12000, scoped, tag = 'internal scratch']
  %s0 = inlined_call_operand.hbm [shape: f32[2,8,32], index: 0, kind: input, shape index: {}]
  %s1 = inlined_call_operand.vmem [shape: f32[1,32], index: 1, kind: input, shape index: {}]
  %s2 = inlined_call_operand.vmem [shape: f32[1,32], index: 2, kind: input, shape index: {}]
  %s3 = inlined_call_operand.hbm [shape: bf16[32,32], index: 3, kind: input, shape index: {}]
  %s4 = inlined_call_operand.hbm [shape: f32[1,32], index: 4, kind: input, shape index: {}]
  %s5 = inlined_call_operand.vmem [shape: bf16[32,32], index: 5, kind: input, shape index: {}]
  %s6 = inlined_call_operand.vmem [shape: f32[1,32], index: 6, kind: input, shape index: {}]
  %s7 = inlined_call_operand.hbm [shape: bf16[32,32], index: 7, kind: input, shape index: {}]
  %s8 = inlined_call_operand.vmem [shape: f32[1,32], index: 8, kind: input, shape index: {}]
  %s9 = inlined_call_operand.vmem [shape: f32[1,32], index: 9, kind: input, shape index: {}]
  %s10 = inlined_call_operand.vmem [shape: f32[1,32], index: 10, kind: input, shape index: {}]
  %s11 = inlined_call_operand.hbm [shape: bf16[2,8,32], index: 11, kind: output, shape index: {0}]
  %s12 = inlined_call_operand.hbm [shape: bf16[2,8,32], index: 12, kind: output, shape index: {1}]
  %s13 = inlined_call_operand.hbm [shape: bf16[2,8,32], index: 13, kind: output, shape index: {2}]
  %s14 = inlined_call_operand.hbm [shape: bf16[2,8,32], index: 14, kind: output, shape index: {3}]
  %15 = xla_tuple %s11, %s12, %s13, %s14
  %s16 = sld [smem:[#allocation0]]
  $region117: #{tpu_custom_call.1} parent=0
    _
  %s18 = ssub.s32 1, %s16
  %s19 = scalar_select 0, %s18, %s16
  $region1: #{tpu_custom_call.1} parent=0
    #allocation2 [shape = 'u8[8192]{0}', space=vmem, size = 0x2000, scoped, tag = 'input window, operand 0']
    #allocation3 [shape = 's32[2]{0}', space=sflag, size = 0x8, scoped, tag = 'scoped memory for tpu_custom_call.1']
    #allocation4 [shape = 's32[2]{0}', space=sflag, size = 0x8, scoped, tag = 'scoped memory for tpu_custom_call.1']
    #allocation5 [shape = 'u8[8192]{0}', space=vmem, size = 0x2000, scoped, tag = 'input window, operand 3, single buffered']
    #allocation6 [shape = 's32[1]{0}', space=sflag, size = 0x4, scoped, tag = 'scoped memory for tpu_custom_call.1']
    #allocation7 [shape = 'u8[512]{0}', space=vmem, size = 0x400, scoped, tag = 'input window, operand 4, single buffered']
    #allocation8 [shape = 'u8[8192]{0}', space=vmem, size = 0x2000, scoped, tag = 'input window, operand 7, single buffered']
    #allocation9 [shape = 's32[1]{0}', space=sflag, size = 0x4, scoped, tag = 'scoped memory for tpu_custom_call.1']
    #allocation10 [shape = 'u8[4096]{0}', space=vmem, size = 0x1000, scoped, tag = 'output window, operand 0']
    #allocation11 [shape = 'u8[4096]{0}', space=vmem, size = 0x1000, scoped, tag = 'output window, operand 1']
    #allocation12 [shape = 's32[2]{0}', space=sflag, size = 0x8, scoped, tag = 'scoped memory for tpu_custom_call.1']
    #allocation13 [shape = 'u8[4096]{0}', space=vmem, size = 0x1000, scoped, tag = 'output window, operand 2']
    #allocation14 [shape = 'u8[4096]{0}', space=vmem, size = 0x1000, scoped, tag = 'output window, operand 3']
    #allocation15 [shape = 's32[2]{0}', space=sflag, size = 0x8, scoped, tag = 'scoped memory for tpu_custom_call.1']
    %20 = vsyncpa [#allocation3], 0
    %s21 = scalar_lea.sflag [#allocation3], 1
    %22 = vsyncpa %s21, 0
    %23 = vsyncpa [#allocation6], 0
    %24 = vsyncpa [#allocation9], 0
    %25 = vsyncpa [#allocation4], 0
    %s26 = scalar_lea.sflag [#allocation4], 1
    %27 = vsyncpa %s26, 0
    %28 = vsyncpa [#allocation12], 0
    %s29 = scalar_lea.sflag [#allocation12], 1
    %30 = vsyncpa %s29, 0
    %31 = vsyncpa [#allocation15], 0
    %s32 = scalar_lea.sflag [#allocation15], 1
    %33 = vsyncpa %s32, 0
    loop: start=0, step=1, limit=4
    $region2: #{tpu_custom_call.1} parent=1 // loop_pre_header
      _
    $region3: #{tpu_custom_call.1} parent=1 // loop_header
      %s35 = sphi 0, %s39
      %p36 = scmp.ge.s32.totalorder %s35, 4
      %s42 = sphi 0, %s54
      %s43 = sphi 0, %s50
      %s44 = sphi 0, %s42
      %s45 = sphi 0, %s43
      %s46 = sphi 0, %s44
      %s47 = sphi 0, %s45
      %s59 = sphi 0, %s61
      %s62 = sphi 0, %s59
      %s63 = sphi 0, %s62
      %s79 = sphi 0, %s63
      %s83 = sphi 0, %s83
      %s85 = sphi 0, %s83
      %s86 = sphi 0, %s85
      %s100 = sphi 0, %s86
      %s104 = sphi 0, %s104
      %s106 = sphi 0, %s104
      %s107 = sphi 0, %s106
      %s121 = sphi 0, %s107
      %s125 = sphi 0, %s125
      %s127 = sphi 0, %s125
      %s128 = sphi 0, %s127
      %s142 = sphi 0, %s128
      %s146 = sphi 0, %s146
      %s148 = sphi 0, %s146
      %s149 = sphi 0, %s148
      %s163 = sphi 0, %s149
      %s167 = sphi 0, %s167
      %s169 = sphi 0, %s167
      %s170 = sphi 0, %s169
      %s184 = sphi 0, %s170
      %s188 = sphi 0, %s188
      %s190 = sphi 0, %s188
      %s191 = sphi 0, %s190
      %s205 = sphi 0, %s191
      %s209 = sphi 0, %s209
      %s211 = sphi 0, %s209
      %s212 = sphi 0, %s211
      %s226 = sphi 0, %s212
      %s230 = sphi 0, %s230
      %s232 = sphi 0, %s230
      %s233 = sphi 0, %s232
      %s247 = sphi 0, %s233
      %s251 = sphi 0, %s251
      %s253 = sphi 0, %s251
      %s254 = sphi 0, %s253
      %s268 = sphi 0, %s254
      %s272 = sphi 0, %s272
      %s274 = sphi 0, %s272
      %s275 = sphi 0, %s274
      %s289 = sphi 0, %s275
      %s297 = sphi 0, %s299
      %s300 = sphi 0, %s297
      %s301 = sphi 0, %s300
      %s317 = sphi 0, %s301
      %s325 = sphi 0, %s327
      %s328 = sphi 0, %s325
      %s329 = sphi 0, %s328
      %s345 = sphi 0, %s329
      %s353 = sphi 0, %s355
      %s356 = sphi 0, %s353
      %s357 = sphi 0, %s356
      %s373 = sphi 0, %s357
      %s381 = sphi 0, %s383
      %s384 = sphi 0, %s381
      %s385 = sphi 0, %s384
      %s401 = sphi 0, %s385
    $region4: #{tpu_custom_call.1} parent=1 // loop_header_branch
      %38 = sbr.rel (%p36) target = $region8
    $region5: #{tpu_custom_call.1} parent=1 // loop_body
      %s40 = ssub.s32 %s35, 1
      %s41 = ssub.s32 %s35, 2
      %s48 = sadd.s32 1, %s43
      %p49 = scmp.ge.s32.totalorder %s48, 1
      %s50 = scalar_select %p49, 0, %s48
      %s51 = sadd.s32 1, %s42
      %s52 = scalar_select %p49, %s51, %s42
      %p53 = scmp.ge.s32.totalorder %s52, 2
      %s54 = scalar_select %p53, 0, %s52
      %s55 = ssub.s32 %s42, %s54
      %s56 = ssub.s32 %s43, %s50
      %s57 = sor.u32 %s55, %s56
      %p58 = scmp.eq.s32.totalorder %s57, 0
      %s60 = sadd.s32 %s59, 1
      %s61 = scalar_select %p58, %s59, %s60
      %p64 = pneg %p58
      %p65 = scmp.eq.s32.totalorder %s35, 1
      %p66 = por %p64, %p65
      %p67 = scmp.ne.s32.totalorder %s59, %s62
      %p68 = scmp.eq.s32.totalorder %s35, 0
      %p69 = por %p67, %p68
      %p70 = scmp.ne.s32.totalorder %s59, %s62
      %p71 = scmp.eq.s32.totalorder %s40, 1
      %p72 = por %p70, %p71
      %p73 = scmp.ne.s32.totalorder %s62, %s63
      %p74 = scmp.eq.s32.totalorder %s40, 0
      %p75 = por %p73, %p74
      %p76 = scmp.ne.s32.totalorder %s62, %s63
      %p77 = scmp.eq.s32.totalorder %s41, 1
      %p78 = por %p76, %p77
      %p80 = scmp.ne.s32.totalorder %s63, %s79
      %p81 = scmp.eq.s32.totalorder %s41, 0
      %p82 = por %p80, %p81
      %s84 = sadd.s32 %s83, 1
      %p87 = scmp.eq.s32.totalorder %s35, 1
      %p88 = scmp.ne.s32.totalorder %s83, %s85
      %p89 = scmp.eq.s32.totalorder %s35, 0
      %p90 = por %p88, %p89
      %p91 = scmp.ne.s32.totalorder %s83, %s85
      %p92 = scmp.eq.s32.totalorder %s40, 1
      %p93 = por %p91, %p92
      %p94 = scmp.ne.s32.totalorder %s85, %s86
      %p95 = scmp.eq.s32.totalorder %s40, 0
      %p96 = por %p94, %p95
      %p97 = scmp.ne.s32.totalorder %s85, %s86
      %p98 = scmp.eq.s32.totalorder %s41, 1
      %p99 = por %p97, %p98
      %p101 = scmp.ne.s32.totalorder %s86, %s100
      %p102 = scmp.eq.s32.totalorder %s41, 0
      %p103 = por %p101, %p102
      %s105 = sadd.s32 %s104, 1
      %p108 = scmp.eq.s32.totalorder %s35, 1
      %p109 = scmp.ne.s32.totalorder %s104, %s106
      %p110 = scmp.eq.s32.totalorder %s35, 0
      %p111 = por %p109, %p110
      %p112 = scmp.ne.s32.totalorder %s104, %s106
      %p113 = scmp.eq.s32.totalorder %s40, 1
      %p114 = por %p112, %p113
      %p115 = scmp.ne.s32.totalorder %s106, %s107
      %p116 = scmp.eq.s32.totalorder %s40, 0
      %p117 = por %p115, %p116
      %p118 = scmp.ne.s32.totalorder %s106, %s107
      %p119 = scmp.eq.s32.totalorder %s41, 1
      %p120 = por %p118, %p119
      %p122 = scmp.ne.s32.totalorder %s107, %s121
      %p123 = scmp.eq.s32.totalorder %s41, 0
      %p124 = por %p122, %p123
      %s126 = sadd.s32 %s125, 1
      %p129 = scmp.eq.s32.totalorder %s35, 1
      %p130 = scmp.ne.s32.totalorder %s125, %s127
      %p131 = scmp.eq.s32.totalorder %s35, 0
      %p132 = por %p130, %p131
      %p133 = scmp.ne.s32.totalorder %s125, %s127
      %p134 = scmp.eq.s32.totalorder %s40, 1
      %p135 = por %p133, %p134
      %p136 = scmp.ne.s32.totalorder %s127, %s128
      %p137 = scmp.eq.s32.totalorder %s40, 0
      %p138 = por %p136, %p137
      %p139 = scmp.ne.s32.totalorder %s127, %s128
      %p140 = scmp.eq.s32.totalorder %s41, 1
      %p141 = por %p139, %p140
      %p143 = scmp.ne.s32.totalorder %s128, %s142
      %p144 = scmp.eq.s32.totalorder %s41, 0
      %p145 = por %p143, %p144
      %s147 = sadd.s32 %s146, 1
      %p150 = scmp.eq.s32.totalorder %s35, 1
      %p151 = scmp.ne.s32.totalorder %s146, %s148
      %p152 = scmp.eq.s32.totalorder %s35, 0
      %p153 = por %p151, %p152
      %p154 = scmp.ne.s32.totalorder %s146, %s148
      %p155 = scmp.eq.s32.totalorder %s40, 1
      %p156 = por %p154, %p155
      %p157 = scmp.ne.s32.totalorder %s148, %s149
      %p158 = scmp.eq.s32.totalorder %s40, 0
      %p159 = por %p157, %p158
      %p160 = scmp.ne.s32.totalorder %s148, %s149
      %p161 = scmp.eq.s32.totalorder %s41, 1
      %p162 = por %p160, %p161
      %p164 = scmp.ne.s32.totalorder %s149, %s163
      %p165 = scmp.eq.s32.totalorder %s41, 0
      %p166 = por %p164, %p165
      %s168 = sadd.s32 %s167, 1
      %p171 = scmp.eq.s32.totalorder %s35, 1
      %p172 = scmp.ne.s32.totalorder %s167, %s169
      %p173 = scmp.eq.s32.totalorder %s35, 0
      %p174 = por %p172, %p173
      %p175 = scmp.ne.s32.totalorder %s167, %s169
      %p176 = scmp.eq.s32.totalorder %s40, 1
      %p177 = por %p175, %p176
      %p178 = scmp.ne.s32.totalorder %s169, %s170
      %p179 = scmp.eq.s32.totalorder %s40, 0
      %p180 = por %p178, %p179
      %p181 = scmp.ne.s32.totalorder %s169, %s170
      %p182 = scmp.eq.s32.totalorder %s41, 1
      %p183 = por %p181, %p182
      %p185 = scmp.ne.s32.totalorder %s170, %s184
      %p186 = scmp.eq.s32.totalorder %s41, 0
      %p187 = por %p185, %p186
      %s189 = sadd.s32 %s188, 1
      %p192 = scmp.eq.s32.totalorder %s35, 1
      %p193 = scmp.ne.s32.totalorder %s188, %s190
      %p194 = scmp.eq.s32.totalorder %s35, 0
      %p195 = por %p193, %p194
      %p196 = scmp.ne.s32.totalorder %s188, %s190
      %p197 = scmp.eq.s32.totalorder %s40, 1
      %p198 = por %p196, %p197
      %p199 = scmp.ne.s32.totalorder %s190, %s191
      %p200 = scmp.eq.s32.totalorder %s40, 0
      %p201 = por %p199, %p200
      %p202 = scmp.ne.s32.totalorder %s190, %s191
      %p203 = scmp.eq.s32.totalorder %s41, 1
      %p204 = por %p202, %p203
      %p206 = scmp.ne.s32.totalorder %s191, %s205
      %p207 = scmp.eq.s32.totalorder %s41, 0
      %p208 = por %p206, %p207
      %s210 = sadd.s32 %s209, 1
      %p213 = scmp.eq.s32.totalorder %s35, 1
      %p214 = scmp.ne.s32.totalorder %s209, %s211
      %p215 = scmp.eq.s32.totalorder %s35, 0
      %p216 = por %p214, %p215
      %p217 = scmp.ne.s32.totalorder %s209, %s211
      %p218 = scmp.eq.s32.totalorder %s40, 1
      %p219 = por %p217, %p218
      %p220 = scmp.ne.s32.totalorder %s211, %s212
      %p221 = scmp.eq.s32.totalorder %s40, 0
      %p222 = por %p220, %p221
      %p223 = scmp.ne.s32.totalorder %s211, %s212
      %p224 = scmp.eq.s32.totalorder %s41, 1
      %p225 = por %p223, %p224
      %p227 = scmp.ne.s32.totalorder %s212, %s226
      %p228 = scmp.eq.s32.totalorder %s41, 0
      %p229 = por %p227, %p228
      %s231 = sadd.s32 %s230, 1
      %p234 = scmp.eq.s32.totalorder %s35, 1
      %p235 = scmp.ne.s32.totalorder %s230, %s232
      %p236 = scmp.eq.s32.totalorder %s35, 0
      %p237 = por %p235, %p236
      %p238 = scmp.ne.s32.totalorder %s230, %s232
      %p239 = scmp.eq.s32.totalorder %s40, 1
      %p240 = por %p238, %p239
      %p241 = scmp.ne.s32.totalorder %s232, %s233
      %p242 = scmp.eq.s32.totalorder %s40, 0
      %p243 = por %p241, %p242
      %p244 = scmp.ne.s32.totalorder %s232, %s233
      %p245 = scmp.eq.s32.totalorder %s41, 1
      %p246 = por %p244, %p245
      %p248 = scmp.ne.s32.totalorder %s233, %s247
      %p249 = scmp.eq.s32.totalorder %s41, 0
      %p250 = por %p248, %p249
      %s252 = sadd.s32 %s251, 1
      %p255 = scmp.eq.s32.totalorder %s35, 1
      %p256 = scmp.ne.s32.totalorder %s251, %s253
      %p257 = scmp.eq.s32.totalorder %s35, 0
      %p258 = por %p256, %p257
      %p259 = scmp.ne.s32.totalorder %s251, %s253
      %p260 = scmp.eq.s32.totalorder %s40, 1
      %p261 = por %p259, %p260
      %p262 = scmp.ne.s32.totalorder %s253, %s254
      %p263 = scmp.eq.s32.totalorder %s40, 0
      %p264 = por %p262, %p263
      %p265 = scmp.ne.s32.totalorder %s253, %s254
      %p266 = scmp.eq.s32.totalorder %s41, 1
      %p267 = por %p265, %p266
      %p269 = scmp.ne.s32.totalorder %s254, %s268
      %p270 = scmp.eq.s32.totalorder %s41, 0
      %p271 = por %p269, %p270
      %s273 = sadd.s32 %s272, 1
      %p276 = scmp.eq.s32.totalorder %s35, 1
      %p277 = scmp.ne.s32.totalorder %s272, %s274
      %p278 = scmp.eq.s32.totalorder %s35, 0
      %p279 = por %p277, %p278
      %p280 = scmp.ne.s32.totalorder %s272, %s274
      %p281 = scmp.eq.s32.totalorder %s40, 1
      %p282 = por %p280, %p281
      %p283 = scmp.ne.s32.totalorder %s274, %s275
      %p284 = scmp.eq.s32.totalorder %s40, 0
      %p285 = por %p283, %p284
      %p286 = scmp.ne.s32.totalorder %s274, %s275
      %p287 = scmp.eq.s32.totalorder %s41, 1
      %p288 = por %p286, %p287
      %p290 = scmp.ne.s32.totalorder %s275, %s289
      %p291 = scmp.eq.s32.totalorder %s41, 0
      %p292 = por %p290, %p291
      %s293 = ssub.s32 %s42, %s54
      %s294 = ssub.s32 %s43, %s50
      %s295 = sor.u32 %s293, %s294
      %p296 = scmp.eq.s32.totalorder %s295, 0
      %s298 = sadd.s32 %s297, 1
      %s299 = scalar_select %p296, %s297, %s298
      %p302 = pneg %p296
      %p303 = scmp.eq.s32.totalorder %s35, 1
      %p304 = por %p302, %p303
      %p305 = scmp.ne.s32.totalorder %s297, %s300
      %p306 = scmp.eq.s32.totalorder %s35, 0
      %p307 = por %p305, %p306
      %p308 = scmp.ne.s32.totalorder %s297, %s300
      %p309 = scmp.eq.s32.totalorder %s40, 1
      %p310 = por %p308, %p309
      %p311 = scmp.ne.s32.totalorder %s300, %s301
      %p312 = scmp.eq.s32.totalorder %s40, 0
      %p313 = por %p311, %p312
      %p314 = scmp.ne.s32.totalorder %s300, %s301
      %p315 = scmp.eq.s32.totalorder %s41, 1
      %p316 = por %p314, %p315
      %p318 = scmp.ne.s32.totalorder %s301, %s317
      %p319 = scmp.eq.s32.totalorder %s41, 0
      %p320 = por %p318, %p319
      %s321 = ssub.s32 %s42, %s54
      %s322 = ssub.s32 %s43, %s50
      %s323 = sor.u32 %s321, %s322
      %p324 = scmp.eq.s32.totalorder %s323, 0
      %s326 = sadd.s32 %s325, 1
      %s327 = scalar_select %p324, %s325, %s326
      %p330 = pneg %p324
      %p331 = scmp.eq.s32.totalorder %s35, 1
      %p332 = por %p330, %p331
      %p333 = scmp.ne.s32.totalorder %s325, %s328
      %p334 = scmp.eq.s32.totalorder %s35, 0
      %p335 = por %p333, %p334
      %p336 = scmp.ne.s32.totalorder %s325, %s328
      %p337 = scmp.eq.s32.totalorder %s40, 1
      %p338 = por %p336, %p337
      %p339 = scmp.ne.s32.totalorder %s328, %s329
      %p340 = scmp.eq.s32.totalorder %s40, 0
      %p341 = por %p339, %p340
      %p342 = scmp.ne.s32.totalorder %s328, %s329
      %p343 = scmp.eq.s32.totalorder %s41, 1
      %p344 = por %p342, %p343
      %p346 = scmp.ne.s32.totalorder %s329, %s345
      %p347 = scmp.eq.s32.totalorder %s41, 0
      %p348 = por %p346, %p347
      %s349 = ssub.s32 %s42, %s54
      %s350 = ssub.s32 %s43, %s50
      %s351 = sor.u32 %s349, %s350
      %p352 = scmp.eq.s32.totalorder %s351, 0
      %s354 = sadd.s32 %s353, 1
      %s355 = scalar_select %p352, %s353, %s354
      %p358 = pneg %p352
      %p359 = scmp.eq.s32.totalorder %s35, 1
      %p360 = por %p358, %p359
      %p361 = scmp.ne.s32.totalorder %s353, %s356
      %p362 = scmp.eq.s32.totalorder %s35, 0
      %p363 = por %p361, %p362
      %p364 = scmp.ne.s32.totalorder %s353, %s356
      %p365 = scmp.eq.s32.totalorder %s40, 1
      %p366 = por %p364, %p365
      %p367 = scmp.ne.s32.totalorder %s356, %s357
      %p368 = scmp.eq.s32.totalorder %s40, 0
      %p369 = por %p367, %p368
      %p370 = scmp.ne.s32.totalorder %s356, %s357
      %p371 = scmp.eq.s32.totalorder %s41, 1
      %p372 = por %p370, %p371
      %p374 = scmp.ne.s32.totalorder %s357, %s373
      %p375 = scmp.eq.s32.totalorder %s41, 0
      %p376 = por %p374, %p375
      %s377 = ssub.s32 %s42, %s54
      %s378 = ssub.s32 %s43, %s50
      %s379 = sor.u32 %s377, %s378
      %p380 = scmp.eq.s32.totalorder %s379, 0
      %s382 = sadd.s32 %s381, 1
      %s383 = scalar_select %p380, %s381, %s382
      %p386 = pneg %p380
      %p387 = scmp.eq.s32.totalorder %s35, 1
      %p388 = por %p386, %p387
      %p389 = scmp.ne.s32.totalorder %s381, %s384
      %p390 = scmp.eq.s32.totalorder %s35, 0
      %p391 = por %p389, %p390
      %p392 = scmp.ne.s32.totalorder %s381, %s384
      %p393 = scmp.eq.s32.totalorder %s40, 1
      %p394 = por %p392, %p393
      %p395 = scmp.ne.s32.totalorder %s384, %s385
      %p396 = scmp.eq.s32.totalorder %s40, 0
      %p397 = por %p395, %p396
      %p398 = scmp.ne.s32.totalorder %s384, %s385
      %p399 = scmp.eq.s32.totalorder %s41, 1
      %p400 = por %p398, %p399
      %p402 = scmp.ne.s32.totalorder %s385, %s401
      %p403 = scmp.eq.s32.totalorder %s41, 0
      %p404 = por %p402, %p403
      %p405 = scmp.le.s32.totalorder 1, %s35
      %p406 = scmp.lt.s32.totalorder %s35, 3
      %p407 = pnand %p405, %p406
      %p408 = pneg %p407
      // Predicated region
      $region9: #{tpu_custom_call.1} parent=5 // pred_check
        _
      $region10: #{tpu_custom_call.1} parent=5 // pred_check_branch
        %410 = sbr.rel (%p407) target = $region12
      $region11: #{tpu_custom_call.1} parent=5 // pred_region
        %s411 = ssub.s32 %s35, 1
        // Predicated region
        $region13: #{tpu_custom_call.1} parent=11 // pred_check
          %p412 = pneg %p96
        $region14: #{tpu_custom_call.1} parent=11 // pred_check_branch
          %414 = sbr.rel (%p412) target = $region16
        $region15: #{tpu_custom_call.1} parent=11 // pred_region
          _
        $region16: #{tpu_custom_call.1} parent=11 // pred_fallthru
          _
        // Predicated region
        $region17: #{tpu_custom_call.1} parent=11 // pred_check
          %p415 = pneg %p117
        $region18: #{tpu_custom_call.1} parent=11 // pred_check_branch
          %417 = sbr.rel (%p415) target = $region20
        $region19: #{tpu_custom_call.1} parent=11 // pred_region
          _
        $region20: #{tpu_custom_call.1} parent=11 // pred_fallthru
          _
        // Predicated region
        $region21: #{tpu_custom_call.1} parent=11 // pred_check
          %p418 = pneg %p138
        $region22: #{tpu_custom_call.1} parent=11 // pred_check_branch
          %420 = sbr.rel (%p418) target = $region24
        $region23: #{tpu_custom_call.1} parent=11 // pred_region
          %s422 = ssub.s32 256, 256
          %423 = vsyncadd [#allocation6], %s422
          %s424 = sshll.u32 [#allocation5], 4
          %s425 = int_to_ptr.vmem [resolvable:$true] %s424
          %430 = dma.hbm_to_vmem [thread:$0]  %s3, 256, %s425, [#allocation6], 64, 64, 4
        $region24: #{tpu_custom_call.1} parent=11 // pred_fallthru
          _
        // Predicated region
        $region25: #{tpu_custom_call.1} parent=11 // pred_check
          %p431 = pneg %p159
        $region26: #{tpu_custom_call.1} parent=11 // pred_check_branch
          %433 = sbr.rel (%p431) target = $region28
        $region27: #{tpu_custom_call.1} parent=11 // pred_region
          %s435 = ssub.s32 16, 16
          %436 = vsyncadd [#allocation6], %s435
          %s438 = sshll.u32 [#allocation7], 4
          %s439 = int_to_ptr.vmem [resolvable:$true] %s438
          %441 = dma.hbm_to_vmem [thread:$0]  %s4, 16, %s439, [#allocation6]
        $region28: #{tpu_custom_call.1} parent=11 // pred_fallthru
          _
        // Predicated region
        $region29: #{tpu_custom_call.1} parent=11 // pred_check
          %p442 = pneg %p180
        $region30: #{tpu_custom_call.1} parent=11 // pred_check_branch
          %444 = sbr.rel (%p442) target = $region32
        $region31: #{tpu_custom_call.1} parent=11 // pred_region
          _
        $region32: #{tpu_custom_call.1} parent=11 // pred_fallthru
          _
        // Predicated region
        $region33: #{tpu_custom_call.1} parent=11 // pred_check
          %p445 = pneg %p201
        $region34: #{tpu_custom_call.1} parent=11 // pred_check_branch
          %447 = sbr.rel (%p445) target = $region36
        $region35: #{tpu_custom_call.1} parent=11 // pred_region
          _
        $region36: #{tpu_custom_call.1} parent=11 // pred_fallthru
          _
        // Predicated region
        $region37: #{tpu_custom_call.1} parent=11 // pred_check
          %p448 = pneg %p222
        $region38: #{tpu_custom_call.1} parent=11 // pred_check_branch
          %450 = sbr.rel (%p448) target = $region40
        $region39: #{tpu_custom_call.1} parent=11 // pred_region
          %s452 = ssub.s32 256, 256
          %453 = vsyncadd [#allocation9], %s452
          %s454 = sshll.u32 [#allocation8], 4
          %s455 = int_to_ptr.vmem [resolvable:$true] %s454
          %460 = dma.hbm_to_vmem [thread:$0]  %s7, 256, %s455, [#allocation9], 64, 64, 4
        $region40: #{tpu_custom_call.1} parent=11 // pred_fallthru
          _
        // Predicated region
        $region41: #{tpu_custom_call.1} parent=11 // pred_check
          %p461 = pneg %p243
        $region42: #{tpu_custom_call.1} parent=11 // pred_check_branch
          %463 = sbr.rel (%p461) target = $region44
        $region43: #{tpu_custom_call.1} parent=11 // pred_region
          _
        $region44: #{tpu_custom_call.1} parent=11 // pred_fallthru
          _
        // Predicated region
        $region45: #{tpu_custom_call.1} parent=11 // pred_check
          %p464 = pneg %p264
        $region46: #{tpu_custom_call.1} parent=11 // pred_check_branch
          %466 = sbr.rel (%p464) target = $region48
        $region47: #{tpu_custom_call.1} parent=11 // pred_region
          _
        $region48: #{tpu_custom_call.1} parent=11 // pred_fallthru
          _
        // Predicated region
        $region49: #{tpu_custom_call.1} parent=11 // pred_check
          %p467 = pneg %p285
        $region50: #{tpu_custom_call.1} parent=11 // pred_check_branch
          %469 = sbr.rel (%p467) target = $region52
        $region51: #{tpu_custom_call.1} parent=11 // pred_region
          _
        $region52: #{tpu_custom_call.1} parent=11 // pred_fallthru
          _
      $region12: #{tpu_custom_call.1} parent=5 // pred_fallthru
        _
      %p470 = scmp.lt.s32.totalorder %s35, 2
      // Predicated region
      $region53: #{tpu_custom_call.1} parent=5 // pred_check
        %p471 = pneg %p470
      $region54: #{tpu_custom_call.1} parent=5 // pred_check_branch
        %473 = sbr.rel (%p471) target = $region56
      $region55: #{tpu_custom_call.1} parent=5 // pred_region
        // Predicated region
        $region57: #{tpu_custom_call.1} parent=55 // pred_check
          %p474 = pneg %p69
        $region58: #{tpu_custom_call.1} parent=55 // pred_check_branch
          %476 = sbr.rel (%p474) target = $region60
        $region59: #{tpu_custom_call.1} parent=55 // pred_region
          %s477 = sand.u32 %s59, 1
          %s478 = scalar_lea.sflag [#allocation3], %s477
          %s479 = sand.u32 %s59, 1
          %s480 = smul.addr %s479, 8
          %s481 = scalar_lea.vmem [#allocation2], %s480
          %s483 = ssub.s32 128, 128
          %484 = vsyncadd %s478, %s483
          %s485 = sadd.s32 %s43, %s42
          %s486 = smul.addr %s485, 128
          %s487 = scalar_lea.hbm %s0, %s486
          %s489 = sshll.u32 %s481, 4
          %s490 = int_to_ptr.vmem [resolvable:$true] %s489
          %492 = dma.hbm_to_vmem [thread:$0]  %s487, 128, %s490, %s478
        $region60: #{tpu_custom_call.1} parent=55 // pred_fallthru
          _
      $region56: #{tpu_custom_call.1} parent=5 // pred_fallthru
        _
      %p493 = scmp.le.s32.totalorder 1, %s35
      %p494 = scmp.lt.s32.totalorder %s35, 3
      %p495 = pnand %p493, %p494
      %p496 = pneg %p495
      // Predicated region
      $region61: #{tpu_custom_call.1} parent=5 // pred_check
        _
      $region62: #{tpu_custom_call.1} parent=5 // pred_check_branch
        %498 = sbr.rel (%p495) target = $region64
      $region63: #{tpu_custom_call.1} parent=5 // pred_region
        %s499 = ssub.s32 %s35, 1
        %s500 = sand.u32 %s62, 1
        %s501 = scalar_lea.sflag [#allocation3], %s500
        %s502 = sand.u32 %s62, 1
        %s503 = smul.addr %s502, 8
        %s504 = scalar_lea.vmem [#allocation2], %s503
        // Predicated region
        $region65: #{tpu_custom_call.1} parent=63 // pred_check
          %p505 = pneg %p75
        $region66: #{tpu_custom_call.1} parent=63 // pred_check_branch
          %507 = sbr.rel (%p505) target = $region68
        $region67: #{tpu_custom_call.1} parent=63 // pred_region
          %508 = dma.done %s501, 128
        $region68: #{tpu_custom_call.1} parent=63 // pred_fallthru
          _
        // Predicated region
        $region69: #{tpu_custom_call.1} parent=63 // pred_check
          %p509 = pneg %p138
        $region70: #{tpu_custom_call.1} parent=63 // pred_check_branch
          %511 = sbr.rel (%p509) target = $region72
        $region71: #{tpu_custom_call.1} parent=63 // pred_region
          %512 = dma.done [#allocation6], 256
        $region72: #{tpu_custom_call.1} parent=63 // pred_fallthru
          _
        // Predicated region
        $region73: #{tpu_custom_call.1} parent=63 // pred_check
          %p513 = pneg %p159
        $region74: #{tpu_custom_call.1} parent=63 // pred_check_branch
          %515 = sbr.rel (%p513) target = $region76
        $region75: #{tpu_custom_call.1} parent=63 // pred_region
          %516 = dma.done [#allocation6], 16
        $region76: #{tpu_custom_call.1} parent=63 // pred_fallthru
          _
        // Predicated region
        $region77: #{tpu_custom_call.1} parent=63 // pred_check
          %p517 = pneg %p222
        $region78: #{tpu_custom_call.1} parent=63 // pred_check_branch
          %519 = sbr.rel (%p517) target = $region80
        $region79: #{tpu_custom_call.1} parent=63 // pred_region
          %520 = dma.done [#allocation9], 256
        $region80: #{tpu_custom_call.1} parent=63 // pred_fallthru
          _
        %s521 = sand.u32 %s62, 1
        %s522 = scalar_lea.sflag [#allocation3], %s521
        %s523 = sand.u32 %s62, 1
        %s524 = smul.addr %s523, 8
        %s525 = scalar_lea.vmem [#allocation2], %s524
        %p526 = pneg %p75
        %p527 = pneg %p72
        %p528 = pneg %p96
        %p529 = pneg %p93
        %p530 = pneg %p117
        %p531 = pneg %p114
        %p532 = pneg %p138
        %p533 = pneg %p135
        %p534 = pneg %p159
        %p535 = pneg %p156
        %p536 = pneg %p180
        %p537 = pneg %p177
        %p538 = pneg %p201
        %p539 = pneg %p198
        %p540 = pneg %p222
        %p541 = pneg %p219
        %p542 = pneg %p243
        %p543 = pneg %p240
        %p544 = pneg %p264
        %p545 = pneg %p261
        %p546 = pneg %p285
        %p547 = pneg %p282
        %p548 = pneg %p313
        %p549 = pneg %p310
        %s550 = sand.u32 %s300, 1
        %s551 = scalar_lea.sflag [#allocation4], %s550
        %s552 = sand.u32 %s300, 1
        %s553 = smul.addr %s552, 4
        %s554 = scalar_lea.vmem [#allocation10], %s553
        %p555 = pneg %p341
        %p556 = pneg %p338
        %s557 = sand.u32 %s40, 1
        %s558 = scalar_lea.sflag [#allocation12], %s557
        %s559 = sand.u32 %s328, 1
        %s560 = smul.addr %s559, 4
        %s561 = scalar_lea.vmem [#allocation11], %s560
        %p562 = pneg %p369
        %p563 = pneg %p366
        %s564 = sand.u32 %s40, 1
        %s565 = scalar_lea.sflag [#allocation12], %s564
        %s566 = sand.u32 %s356, 1
        %s567 = smul.addr %s566, 4
        %s568 = scalar_lea.vmem [#allocation13], %s567
        %p569 = pneg %p397
        %p570 = pneg %p394
        %s571 = sand.u32 %s384, 1
        %s572 = scalar_lea.sflag [#allocation15], %s571
        %s573 = sand.u32 %s384, 1
        %s574 = smul.addr %s573, 4
        %s575 = scalar_lea.vmem [#allocation14], %s574
        %v577 = vld [vmem:[%s504] sm:$0xff]
        %vm578 = vcmask 261120
        %v579 = vsel %vm578, %v577, 0.0
        %580 = vadd.xlane.f32.xlu0 %v579
        %v581 = vpop.xlane.xlu0 %580
        %v582 = vrcp.pop 32.0
        %v583 = vmul.f32 %v581, %v582
        %v584 = vsub.f32 %v577, %v583
        %v585 = vmul.f32 %v584, %v584
        %v586 = vsel %vm578, %v585, 0.0
        %587 = vadd.xlane.f32.xlu0 %v586
        %v588 = vpop.xlane.xlu0 %587
        %v589 = vmul.f32 %v588, %v582
        %v590 = vadd.f32 %v589, 1e-05
        %v591 = vrsqrt.pop %v590
        %v592 = vmul.f32 %v584, %v591
        %v593 = vld [vmem:[%s1] sm:$0x1]
        %v595 = vlaneseq
        %v596 = vshrl.u32 %v595, 7
        %v597 = vsub.s32 0, %v596
        %v598 = vrot.slane %v593, %v597
        %v600 = vmul.f32 %v592, %v598
        %v601 = vld [vmem:[%s2] sm:$0x1]
        %v603 = vlaneseq
        %v604 = vshrl.u32 %v603, 7
        %v605 = vsub.s32 0, %v604
        %v606 = vrot.slane %v601, %v605
        %v608 = vadd.f32 %v600, %v606
        %v609 = vpack.c.bf16 %v608, %v608
        %v610 = vld [vmem:[#allocation5] sm:$0xf]
        %v611 = vld [vmem:[#allocation5 + $0x4] sm:$0xf]
        %v612 = vld [vmem:[#allocation5 + $0x8] sm:$0xf]
        %v613 = vld [vmem:[#allocation5 + $0xc] sm:$0xf]
        %v614 = vld [vmem:[#allocation7] sm:$0x1]
        %v616 = vlaneseq
        %v617 = vshrl.u32 %v616, 7
        %v618 = vsub.s32 0, %v617
        %v619 = vrot.slane %v614, %v618
        %v625 = vunpack.c.l.b16 %v610
        %v626 = vunpack.c.l.b16 %v611
        %v627 = vunpack.c.l.b16 %v612
        %v628 = vunpack.c.l.b16 %v613
        %v629 = vpack.c.b16 %v626, %v625
        %v630 = vpack.c.b16 %v628, %v627
        %v634 = vsel %vm578, %v609, 0
        %636 = vmatprep.subr.bf16.mxu0 0
        %637 = vmatpush1.bf16.msra.mxu0 %v629
        %638 = vmatprep.subr.bf16.mxu0 0
        %639 = vmatpush1.bf16.msra.mxu0 %v630
        %640 = vmatprep.subr.bf16.mxu0 0
        %641 = vmatpush1.bf16.msra.mxu0 0
        %642 = vmatprep.subr.bf16.mxu0 0
        %643 = vmatpush1.bf16.msra.mxu0 0
        %644 = vmatprep.subr.bf16.mxu0 0
        %645 = vmatpush1.bf16.msra.mxu0 0
        %646 = vmatprep.subr.bf16.mxu0 0
        %647 = vmatpush1.bf16.msra.mxu0 0
        %648 = vmatprep.subr.bf16.mxu0 0
        %649 = vmatpush1.bf16.msra.mxu0 0
        %650 = vmatprep.subr.bf16.mxu0 0
        %651 = vmatpush1.bf16.msra.mxu0 0
        %652 = vmatprep.subr.bf16.mxu0 0
        %653 = vmatpush1.bf16.msra.mxu0 0
        %654 = vmatprep.subr.bf16.mxu0 0
        %655 = vmatpush1.bf16.msra.mxu0 0
        %656 = vmatprep.subr.bf16.mxu0 0
        %657 = vmatpush1.bf16.msra.mxu0 0
        %658 = vmatprep.subr.bf16.mxu0 0
        %659 = vmatpush1.bf16.msra.mxu0 0
        %660 = vmatprep.subr.bf16.mxu0 0
        %661 = vmatpush1.bf16.msra.mxu0 0
        %662 = vmatprep.subr.bf16.mxu0 0
        %663 = vmatpush1.bf16.msra.mxu0 0
        %664 = vmatprep.subr.bf16.mxu0 0
        %665 = vmatpush1.bf16.msra.mxu0 0
        %666 = vmatprep.subr.bf16.mxu0 0
        %667 = vmatpush1.bf16.msra.mxu0 0
        %668 = vmatprep.mubr.bf16.mxu0 0
        %669 = vmatmul.mubr.bf16.gmra.mrb[0].mxu0 %v634
        %v670 = vpop.f32.mrb[0].mxu0
        %v671 = vadd.f32 %v619, %v670
        %v672 = vpop.f32.mrb[0].mxu0
        %v673 = vpop.f32.mrb[0].mxu0
        %v674 = vpop.f32.mrb[0].mxu0
        %675 = vdwg.mxu0
        %v676 = vld [vmem:[%s5] sm:$0xf]
        %v677 = vld [vmem:[%s5 + $0x4] sm:$0xf]
        %v678 = vld [vmem:[%s5 + $0x8] sm:$0xf]
        %v679 = vld [vmem:[%s5 + $0xc] sm:$0xf]
        %v680 = vld [vmem:[%s6] sm:$0x1]
        %v682 = vlaneseq
        %v683 = vshrl.u32 %v682, 7
        %v684 = vsub.s32 0, %v683
        %v685 = vrot.slane %v680, %v684
        %v691 = vunpack.c.l.b16 %v676
        %v692 = vunpack.c.l.b16 %v677
        %v693 = vunpack.c.l.b16 %v678
        %v694 = vunpack.c.l.b16 %v679
        %v695 = vpack.c.b16 %v692, %v691
        %v696 = vpack.c.b16 %v694, %v693
        %699 = vmatprep.subr.bf16.mxu0 0
        %700 = vmatpush1.bf16.msra.mxu0 %v695
        %701 = vmatprep.subr.bf16.mxu0 0
        %702 = vmatpush1.bf16.msra.mxu0 %v696
        %703 = vmatprep.subr.bf16.mxu0 0
        %704 = vmatpush1.bf16.msra.mxu0 0
        %705 = vmatprep.subr.bf16.mxu0 0
        %706 = vmatpush1.bf16.msra.mxu0 0
        %707 = vmatprep.subr.bf16.mxu0 0
        %708 = vmatpush1.bf16.msra.mxu0 0
        %709 = vmatprep.subr.bf16.mxu0 0
        %710 = vmatpush1.bf16.msra.mxu0 0
        %711 = vmatprep.subr.bf16.mxu0 0
        %712 = vmatpush1.bf16.msra.mxu0 0
        %713 = vmatprep.subr.bf16.mxu0 0
        %714 = vmatpush1.bf16.msra.mxu0 0
        %715 = vmatprep.subr.bf16.mxu0 0
        %716 = vmatpush1.bf16.msra.mxu0 0
        %717 = vmatprep.subr.bf16.mxu0 0
        %718 = vmatpush1.bf16.msra.mxu0 0
        %719 = vmatprep.subr.bf16.mxu0 0
        %720 = vmatpush1.bf16.msra.mxu0 0
        %721 = vmatprep.subr.bf16.mxu0 0
        %722 = vmatpush1.bf16.msra.mxu0 0
        %723 = vmatprep.subr.bf16.mxu0 0
        %724 = vmatpush1.bf16.msra.mxu0 0
        %725 = vmatprep.subr.bf16.mxu0 0
        %726 = vmatpush1.bf16.msra.mxu0 0
        %727 = vmatprep.subr.bf16.mxu0 0
        %728 = vmatpush1.bf16.msra.mxu0 0
        %729 = vmatprep.subr.bf16.mxu0 0
        %730 = vmatpush1.bf16.msra.mxu0 0
        %731 = vmatprep.mubr.bf16.mxu0 0
        %732 = vmatmul.mubr.bf16.gmra.mrb[0].mxu0 %v634
        %v733 = vpop.f32.mrb[0].mxu0
        %v734 = vadd.f32 %v685, %v733
        %v735 = vpop.f32.mrb[0].mxu0
        %v736 = vpop.f32.mrb[0].mxu0
        %v737 = vpop.f32.mrb[0].mxu0
        %738 = vdwg.mxu0
        %v739 = vld [vmem:[#allocation8] sm:$0xf]
        %v740 = vld [vmem:[#allocation8 + $0x4] sm:$0xf]
        %v741 = vld [vmem:[#allocation8 + $0x8] sm:$0xf]
        %v742 = vld [vmem:[#allocation8 + $0xc] sm:$0xf]
        %v743 = vld [vmem:[%s8] sm:$0x1]
        %v745 = vlaneseq
        %v746 = vshrl.u32 %v745, 7
        %v747 = vsub.s32 0, %v746
        %v748 = vrot.slane %v743, %v747
        %v754 = vunpack.c.l.b16 %v739
        %v755 = vunpack.c.l.b16 %v740
        %v756 = vunpack.c.l.b16 %v741
        %v757 = vunpack.c.l.b16 %v742
        %v758 = vpack.c.b16 %v755, %v754
        %v759 = vpack.c.b16 %v757, %v756
        %762 = vmatprep.subr.bf16.mxu0 0
        %763 = vmatpush1.bf16.msra.mxu0 %v758
        %764 = vmatprep.subr.bf16.mxu0 0
        %765 = vmatpush1.bf16.msra.mxu0 %v759
        %766 = vmatprep.subr.bf16.mxu0 0
        %767 = vmatpush1.bf16.msra.mxu0 0
        %768 = vmatprep.subr.bf16.mxu0 0
        %769 = vmatpush1.bf16.msra.mxu0 0
        %770 = vmatprep.subr.bf16.mxu0 0
        %771 = vmatpush1.bf16.msra.mxu0 0
        %772 = vmatprep.subr.bf16.mxu0 0
        %773 = vmatpush1.bf16.msra.mxu0 0
        %774 = vmatprep.subr.bf16.mxu0 0
        %775 = vmatpush1.bf16.msra.mxu0 0
        %776 = vmatprep.subr.bf16.mxu0 0
        %777 = vmatpush1.bf16.msra.mxu0 0
        %778 = vmatprep.subr.bf16.mxu0 0
        %779 = vmatpush1.bf16.msra.mxu0 0
        %780 = vmatprep.subr.bf16.mxu0 0
        %781 = vmatpush1.bf16.msra.mxu0 0
        %782 = vmatprep.subr.bf16.mxu0 0
        %783 = vmatpush1.bf16.msra.mxu0 0
        %784 = vmatprep.subr.bf16.mxu0 0
        %785 = vmatpush1.bf16.msra.mxu0 0
        %786 = vmatprep.subr.bf16.mxu0 0
        %787 = vmatpush1.bf16.msra.mxu0 0
        %788 = vmatprep.subr.bf16.mxu0 0
        %789 = vmatpush1.bf16.msra.mxu0 0
        %790 = vmatprep.subr.bf16.mxu0 0
        %791 = vmatpush1.bf16.msra.mxu0 0
        %792 = vmatprep.subr.bf16.mxu0 0
        %793 = vmatpush1.bf16.msra.mxu0 0
        %794 = vmatprep.mubr.bf16.mxu0 0
        %795 = vmatmul.mubr.bf16.gmra.mrb[0].mxu0 %v634
        %v796 = vpop.f32.mrb[0].mxu0
        %v797 = vadd.f32 %v748, %v796
        %v798 = vpop.f32.mrb[0].mxu0
        %v799 = vpop.f32.mrb[0].mxu0
        %v800 = vpop.f32.mrb[0].mxu0
        %801 = vdwg.mxu0
        %v802 = vld [vmem:[%s9] sm:$0x1]
        %v804 = vlaneseq
        %v805 = vshrl.u32 %v804, 7
        %v806 = vsub.s32 0, %v805
        %v807 = vrot.slane %v802, %v806
        %v809 = vadd.f32 %v671, %v807
        %v810 = vpack.c.bf16 %v809, %v809
        %vm811 = vcmask 257024
        %812 = vst.msk [vmem:[%s554] sm:$0xf] %vm811, %v810
        %v813 = vld [vmem:[%s10] sm:$0x1]
        %v815 = vlaneseq
        %v816 = vshrl.u32 %v815, 7
        %v817 = vsub.s32 0, %v816
        %v818 = vrot.slane %v813, %v817
        %v820 = vadd.f32 %v671, %v818
        %v821 = vpack.c.bf16 %v820, %v820
        %822 = vst.msk [vmem:[%s561] sm:$0xf] %vm811, %v821
        %v823 = vpack.c.bf16 %v734, %v734
        %824 = vst.msk [vmem:[%s568] sm:$0xf] %vm811, %v823
        %v825 = vpack.c.bf16 %v797, %v797
        %826 = vst.msk [vmem:[%s575] sm:$0xf] %vm811, %v825
        %s827 = sand.u32 %s300, 1
        %s828 = scalar_lea.sflag [#allocation4], %s827
        %s829 = sand.u32 %s300, 1
        %s830 = smul.addr %s829, 4
        %s831 = scalar_lea.vmem [#allocation10], %s830
        %s832 = sand.u32 %s40, 1
        %s833 = scalar_lea.sflag [#allocation12], %s832
        %s834 = sand.u32 %s328, 1
        %s835 = smul.addr %s834, 4
        %s836 = scalar_lea.vmem [#allocation11], %s835
        %s837 = sand.u32 %s40, 1
        %s838 = scalar_lea.sflag [#allocation12], %s837
        %s839 = sand.u32 %s356, 1
        %s840 = smul.addr %s839, 4
        %s841 = scalar_lea.vmem [#allocation13], %s840
        %s842 = sand.u32 %s384, 1
        %s843 = scalar_lea.sflag [#allocation15], %s842
        %s844 = sand.u32 %s384, 1
        %s845 = smul.addr %s844, 4
        %s846 = scalar_lea.vmem [#allocation14], %s845
        // Predicated region
        $region81: #{tpu_custom_call.1} parent=63 // pred_check
          %p847 = pneg %p310
        $region82: #{tpu_custom_call.1} parent=63 // pred_check_branch
          %849 = sbr.rel (%p847) target = $region84
        $region83: #{tpu_custom_call.1} parent=63 // pred_region
          %s851 = ssub.s32 64, 64
          %852 = vsyncadd %s828, %s851
          %s853 = sadd.s32 %s45, %s44
          %s854 = smul.addr %s853, 64
          %s855 = scalar_lea.hbm %s11, %s854
          %s857 = sshll.u32 %s831, 4
          %s858 = int_to_ptr.vmem [resolvable:$true] %s857
          %860 = dma.vmem_to_hbm [thread:$0]  %s858, 64, %s855, %s828
        $region84: #{tpu_custom_call.1} parent=63 // pred_fallthru
          _
        // Predicated region
        $region85: #{tpu_custom_call.1} parent=63 // pred_check
          %p861 = pneg %p338
        $region86: #{tpu_custom_call.1} parent=63 // pred_check_branch
          %863 = sbr.rel (%p861) target = $region88
        $region87: #{tpu_custom_call.1} parent=63 // pred_region
          %s865 = ssub.s32 64, 64
          %866 = vsyncadd %s833, %s865
          %s867 = sadd.s32 %s45, %s44
          %s868 = smul.addr %s867, 64
          %s869 = scalar_lea.hbm %s12, %s868
          %s871 = sshll.u32 %s836, 4
          %s872 = int_to_ptr.vmem [resolvable:$true] %s871
          %874 = dma.vmem_to_hbm [thread:$0]  %s872, 64, %s869, %s833
        $region88: #{tpu_custom_call.1} parent=63 // pred_fallthru
          _
        // Predicated region
        $region89: #{tpu_custom_call.1} parent=63 // pred_check
          %p875 = pneg %p366
        $region90: #{tpu_custom_call.1} parent=63 // pred_check_branch
          %877 = sbr.rel (%p875) target = $region92
        $region91: #{tpu_custom_call.1} parent=63 // pred_region
          %s879 = ssub.s32 64, 64
          %880 = vsyncadd %s838, %s879
          %s881 = sadd.s32 %s45, %s44
          %s882 = smul.addr %s881, 64
          %s883 = scalar_lea.hbm %s13, %s882
          %s885 = sshll.u32 %s841, 4
          %s886 = int_to_ptr.vmem [resolvable:$true] %s885
          %888 = dma.vmem_to_hbm [thread:$0]  %s886, 64, %s883, %s838
        $region92: #{tpu_custom_call.1} parent=63 // pred_fallthru
          _
        // Predicated region
        $region93: #{tpu_custom_call.1} parent=63 // pred_check
          %p889 = pneg %p394
        $region94: #{tpu_custom_call.1} parent=63 // pred_check_branch
          %891 = sbr.rel (%p889) target = $region96
        $region95: #{tpu_custom_call.1} parent=63 // pred_region
          %s893 = ssub.s32 64, 64
          %894 = vsyncadd %s843, %s893
          %s895 = sadd.s32 %s45, %s44
          %s896 = smul.addr %s895, 64
          %s897 = scalar_lea.hbm %s14, %s896
          %s899 = sshll.u32 %s846, 4
          %s900 = int_to_ptr.vmem [resolvable:$true] %s899
          %902 = dma.vmem_to_hbm [thread:$0]  %s900, 64, %s897, %s843
        $region96: #{tpu_custom_call.1} parent=63 // pred_fallthru
          _
      $region64: #{tpu_custom_call.1} parent=5 // pred_fallthru
        _
      %p903 = scmp.le.s32.totalorder 2, %s35
      // Predicated region
      $region97: #{tpu_custom_call.1} parent=5 // pred_check
        %p904 = pneg %p903
      $region98: #{tpu_custom_call.1} parent=5 // pred_check_branch
        %906 = sbr.rel (%p904) target = $region100
      $region99: #{tpu_custom_call.1} parent=5 // pred_region
        %s907 = ssub.s32 %s35, 2
        // Predicated region
        $region101: #{tpu_custom_call.1} parent=99 // pred_check
          %p908 = pneg %p316
        $region102: #{tpu_custom_call.1} parent=99 // pred_check_branch
          %910 = sbr.rel (%p908) target = $region104
        $region103: #{tpu_custom_call.1} parent=99 // pred_region
          %s911 = sand.u32 %s301, 1
          %s912 = scalar_lea.sflag [#allocation4], %s911
          %s913 = sand.u32 %s301, 1
          %s914 = smul.addr %s913, 4
          %s915 = scalar_lea.vmem [#allocation10], %s914
          %916 = dma.done %s912, 64
        $region104: #{tpu_custom_call.1} parent=99 // pred_fallthru
          _
        // Predicated region
        $region105: #{tpu_custom_call.1} parent=99 // pred_check
          %p917 = pneg %p344
        $region106: #{tpu_custom_call.1} parent=99 // pred_check_branch
          %919 = sbr.rel (%p917) target = $region108
        $region107: #{tpu_custom_call.1} parent=99 // pred_region
          %s920 = sand.u32 %s41, 1
          %s921 = scalar_lea.sflag [#allocation12], %s920
          %s922 = sand.u32 %s329, 1
          %s923 = smul.addr %s922, 4
          %s924 = scalar_lea.vmem [#allocation11], %s923
          %925 = dma.done %s921, 64
        $region108: #{tpu_custom_call.1} parent=99 // pred_fallthru
          _
        // Predicated region
        $region109: #{tpu_custom_call.1} parent=99 // pred_check
          %p926 = pneg %p372
        $region110: #{tpu_custom_call.1} parent=99 // pred_check_branch
          %928 = sbr.rel (%p926) target = $region112
        $region111: #{tpu_custom_call.1} parent=99 // pred_region
          %s929 = sand.u32 %s41, 1
          %s930 = scalar_lea.sflag [#allocation12], %s929
          %s931 = sand.u32 %s357, 1
          %s932 = smul.addr %s931, 4
          %s933 = scalar_lea.vmem [#allocation13], %s932
          %934 = dma.done %s930, 64
        $region112: #{tpu_custom_call.1} parent=99 // pred_fallthru
          _
        // Predicated region
        $region113: #{tpu_custom_call.1} parent=99 // pred_check
          %p935 = pneg %p400
        $region114: #{tpu_custom_call.1} parent=99 // pred_check_branch
          %937 = sbr.rel (%p935) target = $region116
        $region115: #{tpu_custom_call.1} parent=99 // pred_region
          %s938 = sand.u32 %s385, 1
          %s939 = scalar_lea.sflag [#allocation15], %s938
          %s940 = sand.u32 %s385, 1
          %s941 = smul.addr %s940, 4
          %s942 = scalar_lea.vmem [#allocation14], %s941
          %943 = dma.done %s939, 64
        $region116: #{tpu_custom_call.1} parent=99 // pred_fallthru
          _
      $region100: #{tpu_custom_call.1} parent=5 // pred_fallthru
        _
    $region6: #{tpu_custom_call.1} parent=1 // loop_footer
      %s39 = sadd.s32 1, %s35
    $region7: #{tpu_custom_call.1} parent=1 // loop_footer_branch
      %34 = sbr.rel target = $region3
    $region8: #{tpu_custom_call.1} parent=1 // loop_exit
      _
    %944 = vsyncpa [#allocation3], 1
    %s945 = scalar_lea.sflag [#allocation3], 1
    %946 = vsyncpa %s945, 1
    %947 = vsyncpa [#allocation6], 1
    %948 = vsyncpa [#allocation9], 1
    %949 = vsyncpa [#allocation4], 1
    %s950 = scalar_lea.sflag [#allocation4], 1
    %951 = vsyncpa %s950, 1
    %952 = vsyncpa [#allocation12], 1
    %s953 = scalar_lea.sflag [#allocation12], 1
    %954 = vsyncpa %s953, 1
    %955 = vsyncpa [#allocation15], 1
    %s956 = scalar_lea.sflag [#allocation15], 1
    %957 = vsyncpa %s956, 1

</llo_original>
